<compile_context>
chip_gen: v6e
topology: v6e:2x2x1
jax: 0.10.0
libtpu: 0.0.40
codegen_flags: <defaults>
</compile_context>

<pallas_src>
import functools

import numpy as np
import jax
import jax.numpy as jnp
from jax.experimental import pallas as pl
from jax.experimental.pallas import tpu as pltpu

C_IN, C1, C2 = 3, 16, 32   # channel widths of the PyTorch module
C_IN_PAD = 16              # input channels zero-padded so im2col stores are tile-aligned
C_OUT_PAD = 8              # stage-4 out channels padded so f32 sublane slices start aligned


# ----------------------------- Pallas kernel ------------------------------- #

def _autoencoder_kernel(x_ref, w1_ref, b1_ref, p1_ref,
                        w2_ref, b2_ref, s2_ref,
                        wt1_ref, bt1_ref, q1_ref,
                        wt2_ref, bt2_ref, q2_ref,
                        o_ref, ic1, ic2, *, wp, r1, wp2, r2, bt):
    f32, bf16 = jnp.float32, jnp.bfloat16
    r1v = r1 - wp - 1          # valid 2x2-window top-left positions, stage 1
    r2v = r2 - wp2 - 1         # stage 2

    for b in range(bt):        # batch block: full pipeline per image (unrolled)
        # ---- stage 1: conv3x3(3->16) + bias + ReLU + maxpool 2x2 ----
        x1 = x_ref[b]                                          # (16, Hp*Wp) bf16
        for t in range(9):                                     # im2col: 9 aligned slab stores
            off = (t // 3) * wp + (t % 3)
            ic1[C_IN_PAD * t:C_IN_PAD * (t + 1), :] = x1[:, off:off + r1]
        y1 = jnp.dot(w1_ref[...], ic1[...], preferred_element_type=f32)   # (16, r1)
        y1 = jnp.maximum(y1 + b1_ref[...], 0.0)
        # window max on the VPU (lane shifts); compaction + zero-pad scatter in one matmul
        hm = jnp.maximum(y1[:, :r1 - 1], y1[:, 1:])
        vm = jnp.maximum(hm[:, :r1v], hm[:, wp:wp + r1v]).astype(bf16)    # (16, r1v)
        xs2 = jnp.dot(vm, p1_ref[...], preferred_element_type=f32).astype(bf16)  # (16, Hp2*Wp2)

        # ---- stage 2: conv3x3(16->32) + bias + ReLU + maxpool 2x2 ----
        for t in range(9):
            off = (t // 3) * wp2 + (t % 3)
            ic2[C1 * t:C1 * (t + 1), :] = xs2[:, off:off + r2]
        y2 = jnp.dot(w2_ref[...], ic2[...], preferred_element_type=f32)   # (32, r2)
        y2 = jnp.maximum(y2 + b2_ref[...], 0.0)
        hm2 = jnp.maximum(y2[:, :r2 - 1], y2[:, 1:])
        vm2 = jnp.maximum(hm2[:, :r2v], hm2[:, wp2:wp2 + r2v]).astype(bf16)
        e2 = jnp.dot(vm2, s2_ref[...], preferred_element_type=f32).astype(bf16)  # (32, H4*W4)

        # ---- stage 3: convT 2x2 stride 2 (32->16) + bias + ReLU ----
        wide1 = jnp.dot(wt1_ref[...], e2, preferred_element_type=f32)     # (4*16, H4*W4)
        cat1 = jnp.concatenate([wide1[C1 * k:C1 * (k + 1), :] for k in range(4)],
                               axis=1).astype(bf16)                       # (16, 4*H4*W4)
        d1 = jnp.dot(cat1, q1_ref[...], preferred_element_type=f32)       # (16, H2*W2)
        d1 = jnp.maximum(d1 + bt1_ref[...], 0.0).astype(bf16)             # bias/ReLU commute
                                                                          # with the permutation
        # ---- stage 4: convT 2x2 stride 2 (16->3) + bias + sigmoid ----
        wide2 = jnp.dot(wt2_ref[...], d1, preferred_element_type=f32)     # (4*8, H2*W2)
        cat2 = jnp.concatenate([wide2[C_OUT_PAD * k:C_OUT_PAD * k + C_IN, :]
                                for k in range(4)], axis=1).astype(bf16)  # (3, 4*H2*W2)
        pre = jnp.dot(cat2, q2_ref[...], preferred_element_type=f32) + bt2_ref[...]  # (3, H*W)
        # numerically stable sigmoid: exp + approx reciprocal both on the EUP
        z = jnp.exp(-jnp.abs(pre))
        rcp = pl.reciprocal(1.0 + z, approx=True)
        sig = jnp.where(pre >= 0.0, rcp, z * rcp)
        o_ref[b] = sig.astype(o_ref.dtype)                                # lane-dense store


# --------------------- constant 0/1 structure matrices ---------------------- #

def _structure_matrices(h, w):
    """Pool-compaction / zero-pad / pixel-shuffle permutation matrices (bf16, exact)."""
    h2, w2, h4, w4 = h // 2, w // 2, h // 4, w // 4
    wp, wp2 = w + 2, w2 + 2
    r1 = (h - 1) * wp + w
    r2 = (h2 - 1) * wp2 + w2
    r1v = r1 - wp - 1
    r2v = r2 - wp2 - 1

    # pool-1 compaction fused with stage-2 zero padding:
    # window-max column 2i*wp+2j -> padded stage-2 column (i+1)*wp2+(j+1)
    p1 = np.zeros((r1v, (h2 + 2) * wp2), np.float32)
    for i in range(h2):
        for j in range(w2):
            p1[2 * i * wp + 2 * j, (i + 1) * wp2 + (j + 1)] = 1.0

    # pool-2 compaction: window-max column 2i*wp2+2j -> column i*w4+j
    s2 = np.zeros((r2v, h4 * w4), np.float32)
    for i in range(h4):
        for j in range(w4):
            s2[2 * i * wp2 + 2 * j, i * w4 + j] = 1.0

    # convT-1 pixel shuffle: column k*(h4*w4)+(i*w4+j) -> (2i+a)*w2+(2j+b), k=2a+b
    q1 = np.zeros((4 * h4 * w4, h2 * w2), np.float32)
    for k in range(4):
        a, b = k // 2, k % 2
        for i in range(h4):
            for j in range(w4):
                q1[k * h4 * w4 + i * w4 + j, (2 * i + a) * w2 + (2 * j + b)] = 1.0

    # convT-2 pixel shuffle: column k*(h2*w2)+(i*w2+j) -> (2i+a)*w+(2j+b)
    q2 = np.zeros((4 * h2 * w2, h * w), np.float32)
    for k in range(4):
        a, b = k // 2, k % 2
        for i in range(h2):
            for j in range(w2):
                q2[k * h2 * w2 + i * w2 + j, (2 * i + a) * w + (2 * j + b)] = 1.0

    bf16 = jnp.bfloat16
    return (jnp.asarray(p1, bf16), jnp.asarray(s2, bf16),
            jnp.asarray(q1, bf16), jnp.asarray(q2, bf16))


# ------------------------------ forward wrapper ----------------------------- #

def conv_autoencoder_forward(x_nchw, params):
    n, c, h, w = x_nchw.shape
    assert c == C_IN and h % 4 == 0 and w % 4 == 0, "expects 3 channels, H/W divisible by 4"
    h2, w2 = h // 2, w // 2
    hp, wp = h + 2, w + 2
    hp2, wp2 = h2 + 2, w2 + 2
    r1 = (h - 1) * wp + w
    r2 = (h2 - 1) * wp2 + w2
    bf16, f32 = jnp.bfloat16, jnp.float32

    # input: zero-pad channels 3->16 and spatial by 1, flatten -> channel-major slab (no transpose)
    xpad = jnp.pad(x_nchw, ((0, 0), (0, C_IN_PAD - C_IN), (1, 1), (1, 1)))
    x_flat = xpad.reshape(n, C_IN_PAD, hp * wp).astype(bf16)

    # weights in channel-major matmul layout, bf16 MXU operands, f32 biases
    w1 = jnp.transpose(params["w1"], (0, 2, 3, 1)).reshape(C1, 9, C_IN)          # (out, tap, cin)
    w1 = jnp.pad(w1, ((0, 0), (0, 0), (0, C_IN_PAD - C_IN))).reshape(C1, 9 * C_IN_PAD).astype(bf16)
    w2 = jnp.transpose(params["w2"], (0, 2, 3, 1)).reshape(C2, 9 * C1).astype(bf16)
    wt1 = jnp.transpose(params["wt1"], (2, 3, 1, 0)).reshape(4 * C1, C2).astype(bf16)   # (64, 32)
    wt2 = jnp.transpose(params["wt2"], (2, 3, 1, 0)).reshape(4, C_IN, C1)
    wt2 = jnp.pad(wt2, ((0, 0), (0, C_OUT_PAD - C_IN), (0, 0))).reshape(4 * C_OUT_PAD, C1).astype(bf16)
    b1 = params["b1"].reshape(C1, 1).astype(f32)
    b2 = params["b2"].reshape(C2, 1).astype(f32)
    bt1 = params["bt1"].reshape(C1, 1).astype(f32)
    bt2 = params["bt2"].reshape(C_IN, 1).astype(f32)

    p1, s2, q1, q2 = _structure_matrices(h, w)

    # batch blocking: amortize per-grid-step overhead, keep >=2 grid steps for megacore
    bt = 1
    for cand in range(min(8, n), 0, -1):
        if n % cand == 0 and n // cand >= 2:
            bt = cand
            break

    kernel = functools.partial(_autoencoder_kernel, wp=wp, r1=r1, wp2=wp2, r2=r2, bt=bt)

    consts = [w1, b1, p1, w2, b2, s2, wt1, bt1, q1, wt2, bt2, q2]
    in_specs = [pl.BlockSpec((bt, C_IN_PAD, hp * wp), lambda g: (g, 0, 0))]
    in_specs += [pl.BlockSpec(a.shape, lambda g: (0, 0)) for a in consts]
    # TODO(synk): single-buffering the constant operands (pl.Buffered(1)) would halve their
    # VMEM footprint; left at the default here since constants total only ~0.3 MB at 16x16.

    out_flat = pl.pallas_call(
        kernel,
        out_shape=jax.ShapeDtypeStruct((n, C_IN, h * w), jnp.float32),
        grid=(n // bt,),
        in_specs=in_specs,
        out_specs=pl.BlockSpec((bt, C_IN, h * w), lambda g: (g, 0, 0)),
        scratch_shapes=[pltpu.VMEM((9 * C_IN_PAD, r1), bf16),   # stage-1 im2col slab
                        pltpu.VMEM((9 * C1, r2), bf16)],        # stage-2 im2col slab
        compiler_params=pltpu.CompilerParams(
            dimension_semantics=("parallel",)),
    )(x_flat, *consts)

    # channel-major output reshapes straight to NCHW -- no transpose needed
    return out_flat.reshape(n, C_IN, h, w)


# --------------------------------- params ----------------------------------- #

def init_params(key):
    """Deterministic parameter init (PyTorch-layout weight tensors)."""
    ks = jax.random.split(key, 8)

    def u(k, shape, fan_in):
        bound = 1.0 / jnp.sqrt(fan_in)
        return jax.random.uniform(k, shape, jnp.float32, -bound, bound)

    return {
        "w1": u(ks[0], (16, 3, 3, 3), 3 * 9),
        "b1": u(ks[1], (16,), 3 * 9),
        "w2": u(ks[2], (32, 16, 3, 3), 16 * 9),
        "b2": u(ks[3], (32,), 16 * 9),
        "wt1": u(ks[4], (32, 16, 2, 2), 32 * 4),
        "bt1": u(ks[5], (16,), 32 * 4),
        "wt2": u(ks[6], (16, 3, 2, 2), 16 * 4),
        "bt2": u(ks[7], (3,), 16 * 4),
    }


if __name__ == "__main__":
    key = jax.random.PRNGKey(0)
    k_x, k_p = jax.random.split(key)
    x = jax.random.normal(k_x, (2, 3, 16, 16), dtype=jnp.float32)  # NCHW input
    params = init_params(k_p)

    fwd = jax.jit(conv_autoencoder_forward)
    out = jax.block_until_ready(fwd(x, params))

    assert out.shape == (2, 3, 16, 16), out.shape
    assert out.dtype == jnp.float32
    assert bool(jnp.all(jnp.isfinite(out)))
    # sigmoid output must lie in [0, 1]
    assert bool(jnp.all((out >= 0.0) & (out <= 1.0)))
    print("KERNEL_OK")
</pallas_src>

<mosaic_0001>
module attributes {stable_mosaic.version = 11 : i64} {
  func.func @_autoencoder_kernel(%arg0: i32, %arg1: memref<1x16x324xbf16, #tpu.memory_space<vmem>>, %arg2: memref<16x144xbf16, #tpu.memory_space<vmem>>, %arg3: memref<16x1xf32, #tpu.memory_space<vmem>>, %arg4: memref<267x100xbf16, #tpu.memory_space<vmem>>, %arg5: memref<32x144xbf16, #tpu.memory_space<vmem>>, %arg6: memref<32x1xf32, #tpu.memory_space<vmem>>, %arg7: memref<67x16xbf16, #tpu.memory_space<vmem>>, %arg8: memref<64x32xbf16, #tpu.memory_space<vmem>>, %arg9: memref<16x1xf32, #tpu.memory_space<vmem>>, %arg10: memref<64x64xbf16, #tpu.memory_space<vmem>>, %arg11: memref<32x16xbf16, #tpu.memory_space<vmem>>, %arg12: memref<3x1xf32, #tpu.memory_space<vmem>>, %arg13: memref<256x256xbf16, #tpu.memory_space<vmem>>, %arg14: memref<1x3x256xf32, #tpu.memory_space<vmem>>, %arg15: memref<144x286xbf16, #tpu.memory_space<vmem>>, %arg16: memref<144x78xbf16, #tpu.memory_space<vmem>>) attributes {dimension_semantics = [#tpu.dimension_semantics<parallel>], iteration_bounds = array<i64: 2>, scalar_prefetch = 0 : i64, scratch_operands = 2 : i64, tpu.core_type = #tpu.core_type<tc>, window_params = [{transform_indices = @transform_0, window_bounds = array<i64: 1, 16, 324>}, {pipeline_mode = #tpu.pipeline_mode<synchronous>, transform_indices = @transform_1, window_bounds = array<i64: 16, 144>}, {pipeline_mode = #tpu.pipeline_mode<synchronous>, transform_indices = @transform_2, window_bounds = array<i64: 16, 1>}, {pipeline_mode = #tpu.pipeline_mode<synchronous>, transform_indices = @transform_3, window_bounds = array<i64: 267, 100>}, {pipeline_mode = #tpu.pipeline_mode<synchronous>, transform_indices = @transform_4, window_bounds = array<i64: 32, 144>}, {pipeline_mode = #tpu.pipeline_mode<synchronous>, transform_indices = @transform_5, window_bounds = array<i64: 32, 1>}, {pipeline_mode = #tpu.pipeline_mode<synchronous>, transform_indices = @transform_6, window_bounds = array<i64: 67, 16>}, {pipeline_mode = #tpu.pipeline_mode<synchronous>, transform_indices = @transform_7, window_bounds = array<i64: 64, 32>}, {pipeline_mode = #tpu.pipeline_mode<synchronous>, transform_indices = @transform_8, window_bounds = array<i64: 16, 1>}, {pipeline_mode = #tpu.pipeline_mode<synchronous>, transform_indices = @transform_9, window_bounds = array<i64: 64, 64>}, {pipeline_mode = #tpu.pipeline_mode<synchronous>, transform_indices = @transform_10, window_bounds = array<i64: 32, 16>}, {pipeline_mode = #tpu.pipeline_mode<synchronous>, transform_indices = @transform_11, window_bounds = array<i64: 3, 1>}, {pipeline_mode = #tpu.pipeline_mode<synchronous>, transform_indices = @transform_12, window_bounds = array<i64: 256, 256>}, {transform_indices = @transform_13, window_bounds = array<i64: 1, 3, 256>}]} {
    %c0 = arith.constant 0 : index
    %c0_0 = arith.constant 0 : index
    %c0_1 = arith.constant 0 : index
    %0 = vector.load %arg1[%c0, %c0_0, %c0_1] : memref<1x16x324xbf16, #tpu.memory_space<vmem>>, vector<1x16x324xbf16>
    %1 = vector.shape_cast %0 : vector<1x16x324xbf16> to vector<16x324xbf16>
    %2 = vector.extract_strided_slice %1 {offsets = [0, 0], sizes = [16, 286], strides = [1, 1]} : vector<16x324xbf16> to vector<16x286xbf16>
    %c0_2 = arith.constant 0 : index
    %c0_3 = arith.constant 0 : index
    %3 = vector.load %arg15[%c0_2, %c0_3] : memref<144x286xbf16, #tpu.memory_space<vmem>>, vector<16x286xbf16>
    tpu.vector_store %arg15[%c0_2, %c0_3], %2 {strides = array<i32>} : memref<144x286xbf16, #tpu.memory_space<vmem>>, vector<16x286xbf16>,
    %4 = vector.extract_strided_slice %1 {offsets = [0, 1], sizes = [16, 286], strides = [1, 1]} : vector<16x324xbf16> to vector<16x286xbf16>
    %c16 = arith.constant 16 : index
    %c0_4 = arith.constant 0 : index
    %5 = vector.load %arg15[%c16, %c0_4] : memref<144x286xbf16, #tpu.memory_space<vmem>>, vector<16x286xbf16>
    tpu.vector_store %arg15[%c16, %c0_4], %4 {strides = array<i32>} : memref<144x286xbf16, #tpu.memory_space<vmem>>, vector<16x286xbf16>,
    %6 = vector.extract_strided_slice %1 {offsets = [0, 2], sizes = [16, 286], strides = [1, 1]} : vector<16x324xbf16> to vector<16x286xbf16>
    %c32 = arith.constant 32 : index
    %c0_5 = arith.constant 0 : index
    %7 = vector.load %arg15[%c32, %c0_5] : memref<144x286xbf16, #tpu.memory_space<vmem>>, vector<16x286xbf16>
    tpu.vector_store %arg15[%c32, %c0_5], %6 {strides = array<i32>} : memref<144x286xbf16, #tpu.memory_space<vmem>>, vector<16x286xbf16>,
    %8 = vector.extract_strided_slice %1 {offsets = [0, 18], sizes = [16, 286], strides = [1, 1]} : vector<16x324xbf16> to vector<16x286xbf16>
    %c48 = arith.constant 48 : index
    %c0_6 = arith.constant 0 : index
    %9 = vector.load %arg15[%c48, %c0_6] : memref<144x286xbf16, #tpu.memory_space<vmem>>, vector<16x286xbf16>
    tpu.vector_store %arg15[%c48, %c0_6], %8 {strides = array<i32>} : memref<144x286xbf16, #tpu.memory_space<vmem>>, vector<16x286xbf16>,
    %10 = vector.extract_strided_slice %1 {offsets = [0, 19], sizes = [16, 286], strides = [1, 1]} : vector<16x324xbf16> to vector<16x286xbf16>
    %c64 = arith.constant 64 : index
    %c0_7 = arith.constant 0 : index
    %11 = vector.load %arg15[%c64, %c0_7] : memref<144x286xbf16, #tpu.memory_space<vmem>>, vector<16x286xbf16>
    tpu.vector_store %arg15[%c64, %c0_7], %10 {strides = array<i32>} : memref<144x286xbf16, #tpu.memory_space<vmem>>, vector<16x286xbf16>,
    %12 = vector.extract_strided_slice %1 {offsets = [0, 20], sizes = [16, 286], strides = [1, 1]} : vector<16x324xbf16> to vector<16x286xbf16>
    %c80 = arith.constant 80 : index
    %c0_8 = arith.constant 0 : index
    %13 = vector.load %arg15[%c80, %c0_8] : memref<144x286xbf16, #tpu.memory_space<vmem>>, vector<16x286xbf16>
    tpu.vector_store %arg15[%c80, %c0_8], %12 {strides = array<i32>} : memref<144x286xbf16, #tpu.memory_space<vmem>>, vector<16x286xbf16>,
    %14 = vector.extract_strided_slice %1 {offsets = [0, 36], sizes = [16, 286], strides = [1, 1]} : vector<16x324xbf16> to vector<16x286xbf16>
    %c96 = arith.constant 96 : index
    %c0_9 = arith.constant 0 : index
    %15 = vector.load %arg15[%c96, %c0_9] : memref<144x286xbf16, #tpu.memory_space<vmem>>, vector<16x286xbf16>
    tpu.vector_store %arg15[%c96, %c0_9], %14 {strides = array<i32>} : memref<144x286xbf16, #tpu.memory_space<vmem>>, vector<16x286xbf16>,
    %16 = vector.extract_strided_slice %1 {offsets = [0, 37], sizes = [16, 286], strides = [1, 1]} : vector<16x324xbf16> to vector<16x286xbf16>
    %c112 = arith.constant 112 : index
    %c0_10 = arith.constant 0 : index
    %17 = vector.load %arg15[%c112, %c0_10] : memref<144x286xbf16, #tpu.memory_space<vmem>>, vector<16x286xbf16>
    tpu.vector_store %arg15[%c112, %c0_10], %16 {strides = array<i32>} : memref<144x286xbf16, #tpu.memory_space<vmem>>, vector<16x286xbf16>,
    %18 = vector.extract_strided_slice %1 {offsets = [0, 38], sizes = [16, 286], strides = [1, 1]} : vector<16x324xbf16> to vector<16x286xbf16>
    %c128 = arith.constant 128 : index
    %c0_11 = arith.constant 0 : index
    %19 = vector.load %arg15[%c128, %c0_11] : memref<144x286xbf16, #tpu.memory_space<vmem>>, vector<16x286xbf16>
    tpu.vector_store %arg15[%c128, %c0_11], %18 {strides = array<i32>} : memref<144x286xbf16, #tpu.memory_space<vmem>>, vector<16x286xbf16>,
    %c0_12 = arith.constant 0 : index
    %c0_13 = arith.constant 0 : index
    %20 = vector.load %arg2[%c0_12, %c0_13] : memref<16x144xbf16, #tpu.memory_space<vmem>>, vector<16x144xbf16>
    %c0_14 = arith.constant 0 : index
    %c0_15 = arith.constant 0 : index
    %21 = vector.load %arg15[%c0_14, %c0_15] : memref<144x286xbf16, #tpu.memory_space<vmem>>, vector<144x286xbf16>
    %cst = arith.constant dense<0.000000e+00> : vector<16x286xf32>
    %22 = tpu.matmul %20, %21, %cst {dimension_numbers = #tpu.dot_dimension_numbers<[1], [0], [0], [1], [0, 0, 1, 1], [], []>} : vector<16x144xbf16>, vector<144x286xbf16>, vector<16x286xf32> -> vector<16x286xf32>
    %c0_16 = arith.constant 0 : index
    %c0_17 = arith.constant 0 : index
    %23 = vector.load %arg3[%c0_16, %c0_17] : memref<16x1xf32, #tpu.memory_space<vmem>>, vector<16x1xf32>
    %24 = vector.broadcast %23 : vector<16x1xf32> to vector<16x286xf32>
    %25 = arith.addf %22, %24 : vector<16x286xf32>
    %cst_18 = arith.constant 0.000000e+00 : f32
    %26 = vector.broadcast %cst_18 : f32 to vector<16x286xf32>
    %27 = arith.maximumf %25, %26 : vector<16x286xf32>
    %28 = vector.extract_strided_slice %27 {offsets = [0, 0], sizes = [16, 285], strides = [1, 1]} : vector<16x286xf32> to vector<16x285xf32>
    %29 = vector.extract_strided_slice %27 {offsets = [0, 1], sizes = [16, 285], strides = [1, 1]} : vector<16x286xf32> to vector<16x285xf32>
    %30 = arith.maximumf %28, %29 : vector<16x285xf32>
    %31 = vector.extract_strided_slice %30 {offsets = [0, 0], sizes = [16, 267], strides = [1, 1]} : vector<16x285xf32> to vector<16x267xf32>
    %32 = vector.extract_strided_slice %30 {offsets = [0, 18], sizes = [16, 267], strides = [1, 1]} : vector<16x285xf32> to vector<16x267xf32>
    %33 = arith.maximumf %31, %32 : vector<16x267xf32>
    %34 = arith.truncf %33 : vector<16x267xf32> to vector<16x267xbf16>
    %c0_19 = arith.constant 0 : index
    %c0_20 = arith.constant 0 : index
    %35 = vector.load %arg4[%c0_19, %c0_20] : memref<267x100xbf16, #tpu.memory_space<vmem>>, vector<267x100xbf16>
    %cst_21 = arith.constant dense<0.000000e+00> : vector<16x100xf32>
    %36 = tpu.matmul %34, %35, %cst_21 {dimension_numbers = #tpu.dot_dimension_numbers<[1], [0], [0], [1], [0, 0, 1, 1], [], []>} : vector<16x267xbf16>, vector<267x100xbf16>, vector<16x100xf32> -> vector<16x100xf32>
    %37 = arith.truncf %36 : vector<16x100xf32> to vector<16x100xbf16>
    %38 = vector.extract_strided_slice %37 {offsets = [0, 0], sizes = [16, 78], strides = [1, 1]} : vector<16x100xbf16> to vector<16x78xbf16>
    %c0_22 = arith.constant 0 : index
    %c0_23 = arith.constant 0 : index
    %39 = vector.load %arg16[%c0_22, %c0_23] : memref<144x78xbf16, #tpu.memory_space<vmem>>, vector<16x78xbf16>
    tpu.vector_store %arg16[%c0_22, %c0_23], %38 {strides = array<i32>} : memref<144x78xbf16, #tpu.memory_space<vmem>>, vector<16x78xbf16>,
    %40 = vector.extract_strided_slice %37 {offsets = [0, 1], sizes = [16, 78], strides = [1, 1]} : vector<16x100xbf16> to vector<16x78xbf16>
    %c16_24 = arith.constant 16 : index
    %c0_25 = arith.constant 0 : index
    %41 = vector.load %arg16[%c16_24, %c0_25] : memref<144x78xbf16, #tpu.memory_space<vmem>>, vector<16x78xbf16>
    tpu.vector_store %arg16[%c16_24, %c0_25], %40 {strides = array<i32>} : memref<144x78xbf16, #tpu.memory_space<vmem>>, vector<16x78xbf16>,
    %42 = vector.extract_strided_slice %37 {offsets = [0, 2], sizes = [16, 78], strides = [1, 1]} : vector<16x100xbf16> to vector<16x78xbf16>
    %c32_26 = arith.constant 32 : index
    %c0_27 = arith.constant 0 : index
    %43 = vector.load %arg16[%c32_26, %c0_27] : memref<144x78xbf16, #tpu.memory_space<vmem>>, vector<16x78xbf16>
    tpu.vector_store %arg16[%c32_26, %c0_27], %42 {strides = array<i32>} : memref<144x78xbf16, #tpu.memory_space<vmem>>, vector<16x78xbf16>,
    %44 = vector.extract_strided_slice %37 {offsets = [0, 10], sizes = [16, 78], strides = [1, 1]} : vector<16x100xbf16> to vector<16x78xbf16>
    %c48_28 = arith.constant 48 : index
    %c0_29 = arith.constant 0 : index
    %45 = vector.load %arg16[%c48_28, %c0_29] : memref<144x78xbf16, #tpu.memory_space<vmem>>, vector<16x78xbf16>
    tpu.vector_store %arg16[%c48_28, %c0_29], %44 {strides = array<i32>} : memref<144x78xbf16, #tpu.memory_space<vmem>>, vector<16x78xbf16>,
    %46 = vector.extract_strided_slice %37 {offsets = [0, 11], sizes = [16, 78], strides = [1, 1]} : vector<16x100xbf16> to vector<16x78xbf16>
    %c64_30 = arith.constant 64 : index
    %c0_31 = arith.constant 0 : index
    %47 = vector.load %arg16[%c64_30, %c0_31] : memref<144x78xbf16, #tpu.memory_space<vmem>>, vector<16x78xbf16>
    tpu.vector_store %arg16[%c64_30, %c0_31], %46 {strides = array<i32>} : memref<144x78xbf16, #tpu.memory_space<vmem>>, vector<16x78xbf16>,
    %48 = vector.extract_strided_slice %37 {offsets = [0, 12], sizes = [16, 78], strides = [1, 1]} : vector<16x100xbf16> to vector<16x78xbf16>
    %c80_32 = arith.constant 80 : index
    %c0_33 = arith.constant 0 : index
    %49 = vector.load %arg16[%c80_32, %c0_33] : memref<144x78xbf16, #tpu.memory_space<vmem>>, vector<16x78xbf16>
    tpu.vector_store %arg16[%c80_32, %c0_33], %48 {strides = array<i32>} : memref<144x78xbf16, #tpu.memory_space<vmem>>, vector<16x78xbf16>,
    %50 = vector.extract_strided_slice %37 {offsets = [0, 20], sizes = [16, 78], strides = [1, 1]} : vector<16x100xbf16> to vector<16x78xbf16>
    %c96_34 = arith.constant 96 : index
    %c0_35 = arith.constant 0 : index
    %51 = vector.load %arg16[%c96_34, %c0_35] : memref<144x78xbf16, #tpu.memory_space<vmem>>, vector<16x78xbf16>
    tpu.vector_store %arg16[%c96_34, %c0_35], %50 {strides = array<i32>} : memref<144x78xbf16, #tpu.memory_space<vmem>>, vector<16x78xbf16>,
    %52 = vector.extract_strided_slice %37 {offsets = [0, 21], sizes = [16, 78], strides = [1, 1]} : vector<16x100xbf16> to vector<16x78xbf16>
    %c112_36 = arith.constant 112 : index
    %c0_37 = arith.constant 0 : index
    %53 = vector.load %arg16[%c112_36, %c0_37] : memref<144x78xbf16, #tpu.memory_space<vmem>>, vector<16x78xbf16>
    tpu.vector_store %arg16[%c112_36, %c0_37], %52 {strides = array<i32>} : memref<144x78xbf16, #tpu.memory_space<vmem>>, vector<16x78xbf16>,
    %54 = vector.extract_strided_slice %37 {offsets = [0, 22], sizes = [16, 78], strides = [1, 1]} : vector<16x100xbf16> to vector<16x78xbf16>
    %c128_38 = arith.constant 128 : index
    %c0_39 = arith.constant 0 : index
    %55 = vector.load %arg16[%c128_38, %c0_39] : memref<144x78xbf16, #tpu.memory_space<vmem>>, vector<16x78xbf16>
    tpu.vector_store %arg16[%c128_38, %c0_39], %54 {strides = array<i32>} : memref<144x78xbf16, #tpu.memory_space<vmem>>, vector<16x78xbf16>,
    %c0_40 = arith.constant 0 : index
    %c0_41 = arith.constant 0 : index
    %56 = vector.load %arg5[%c0_40, %c0_41] : memref<32x144xbf16, #tpu.memory_space<vmem>>, vector<32x144xbf16>
    %c0_42 = arith.constant 0 : index
    %c0_43 = arith.constant 0 : index
    %57 = vector.load %arg16[%c0_42, %c0_43] : memref<144x78xbf16, #tpu.memory_space<vmem>>, vector<144x78xbf16>
    %cst_44 = arith.constant dense<0.000000e+00> : vector<32x78xf32>
    %58 = tpu.matmul %56, %57, %cst_44 {dimension_numbers = #tpu.dot_dimension_numbers<[1], [0], [0], [1], [0, 0, 1, 1], [], []>} : vector<32x144xbf16>, vector<144x78xbf16>, vector<32x78xf32> -> vector<32x78xf32>
    %c0_45 = arith.constant 0 : index
    %c0_46 = arith.constant 0 : index
    %59 = vector.load %arg6[%c0_45, %c0_46] : memref<32x1xf32, #tpu.memory_space<vmem>>, vector<32x1xf32>
    %60 = vector.broadcast %59 : vector<32x1xf32> to vector<32x78xf32>
    %61 = arith.addf %58, %60 : vector<32x78xf32>
    %cst_47 = arith.constant 0.000000e+00 : f32
    %62 = vector.broadcast %cst_47 : f32 to vector<32x78xf32>
    %63 = arith.maximumf %61, %62 : vector<32x78xf32>
    %64 = vector.extract_strided_slice %63 {offsets = [0, 0], sizes = [32, 77], strides = [1, 1]} : vector<32x78xf32> to vector<32x77xf32>
    %65 = vector.extract_strided_slice %63 {offsets = [0, 1], sizes = [32, 77], strides = [1, 1]} : vector<32x78xf32> to vector<32x77xf32>
    %66 = arith.maximumf %64, %65 : vector<32x77xf32>
    %67 = vector.extract_strided_slice %66 {offsets = [0, 0], sizes = [32, 67], strides = [1, 1]} : vector<32x77xf32> to vector<32x67xf32>
    %68 = vector.extract_strided_slice %66 {offsets = [0, 10], sizes = [32, 67], strides = [1, 1]} : vector<32x77xf32> to vector<32x67xf32>
    %69 = arith.maximumf %67, %68 : vector<32x67xf32>
    %70 = arith.truncf %69 : vector<32x67xf32> to vector<32x67xbf16>
    %c0_48 = arith.constant 0 : index
    %c0_49 = arith.constant 0 : index
    %71 = vector.load %arg7[%c0_48, %c0_49] : memref<67x16xbf16, #tpu.memory_space<vmem>>, vector<67x16xbf16>
    %cst_50 = arith.constant dense<0.000000e+00> : vector<32x16xf32>
    %72 = tpu.matmul %70, %71, %cst_50 {dimension_numbers = #tpu.dot_dimension_numbers<[1], [0], [0], [1], [0, 0, 1, 1], [], []>} : vector<32x67xbf16>, vector<67x16xbf16>, vector<32x16xf32> -> vector<32x16xf32>
    %73 = arith.truncf %72 : vector<32x16xf32> to vector<32x16xbf16>
    %c0_51 = arith.constant 0 : index
    %c0_52 = arith.constant 0 : index
    %74 = vector.load %arg8[%c0_51, %c0_52] : memref<64x32xbf16, #tpu.memory_space<vmem>>, vector<64x32xbf16>
    %cst_53 = arith.constant dense<0.000000e+00> : vector<64x16xf32>
    %75 = tpu.matmul %74, %73, %cst_53 {dimension_numbers = #tpu.dot_dimension_numbers<[1], [0], [0], [1], [0, 0, 1, 1], [], []>} : vector<64x32xbf16>, vector<32x16xbf16>, vector<64x16xf32> -> vector<64x16xf32>
    %76 = vector.extract_strided_slice %75 {offsets = [0, 0], sizes = [16, 16], strides = [1, 1]} : vector<64x16xf32> to vector<16x16xf32>
    %77 = vector.extract_strided_slice %75 {offsets = [16, 0], sizes = [16, 16], strides = [1, 1]} : vector<64x16xf32> to vector<16x16xf32>
    %78 = vector.extract_strided_slice %75 {offsets = [32, 0], sizes = [16, 16], strides = [1, 1]} : vector<64x16xf32> to vector<16x16xf32>
    %79 = vector.extract_strided_slice %75 {offsets = [48, 0], sizes = [16, 16], strides = [1, 1]} : vector<64x16xf32> to vector<16x16xf32>
    %80 = tpu.concatenate %76, %77, %78, %79 in 1 : vector<16x16xf32>, vector<16x16xf32>, vector<16x16xf32>, vector<16x16xf32> -> vector<16x64xf32>
    %81 = arith.truncf %80 : vector<16x64xf32> to vector<16x64xbf16>
    %c0_54 = arith.constant 0 : index
    %c0_55 = arith.constant 0 : index
    %82 = vector.load %arg10[%c0_54, %c0_55] : memref<64x64xbf16, #tpu.memory_space<vmem>>, vector<64x64xbf16>
    %cst_56 = arith.constant dense<0.000000e+00> : vector<16x64xf32>
    %83 = tpu.matmul %81, %82, %cst_56 {dimension_numbers = #tpu.dot_dimension_numbers<[1], [0], [0], [1], [0, 0, 1, 1], [], []>} : vector<16x64xbf16>, vector<64x64xbf16>, vector<16x64xf32> -> vector<16x64xf32>
    %c0_57 = arith.constant 0 : index
    %c0_58 = arith.constant 0 : index
    %84 = vector.load %arg9[%c0_57, %c0_58] : memref<16x1xf32, #tpu.memory_space<vmem>>, vector<16x1xf32>
    %85 = vector.broadcast %84 : vector<16x1xf32> to vector<16x64xf32>
    %86 = arith.addf %83, %85 : vector<16x64xf32>
    %cst_59 = arith.constant 0.000000e+00 : f32
    %87 = vector.broadcast %cst_59 : f32 to vector<16x64xf32>
    %88 = arith.maximumf %86, %87 : vector<16x64xf32>
    %89 = arith.truncf %88 : vector<16x64xf32> to vector<16x64xbf16>
    %c0_60 = arith.constant 0 : index
    %c0_61 = arith.constant 0 : index
    %90 = vector.load %arg11[%c0_60, %c0_61] : memref<32x16xbf16, #tpu.memory_space<vmem>>, vector<32x16xbf16>
    %cst_62 = arith.constant dense<0.000000e+00> : vector<32x64xf32>
    %91 = tpu.matmul %90, %89, %cst_62 {dimension_numbers = #tpu.dot_dimension_numbers<[1], [0], [0], [1], [0, 0, 1, 1], [], []>} : vector<32x16xbf16>, vector<16x64xbf16>, vector<32x64xf32> -> vector<32x64xf32>
    %92 = vector.extract_strided_slice %91 {offsets = [0, 0], sizes = [3, 64], strides = [1, 1]} : vector<32x64xf32> to vector<3x64xf32>
    %93 = vector.extract_strided_slice %91 {offsets = [8, 0], sizes = [3, 64], strides = [1, 1]} : vector<32x64xf32> to vector<3x64xf32>
    %94 = vector.extract_strided_slice %91 {offsets = [16, 0], sizes = [3, 64], strides = [1, 1]} : vector<32x64xf32> to vector<3x64xf32>
    %95 = vector.extract_strided_slice %91 {offsets = [24, 0], sizes = [3, 64], strides = [1, 1]} : vector<32x64xf32> to vector<3x64xf32>
    %96 = tpu.concatenate %92, %93, %94, %95 in 1 : vector<3x64xf32>, vector<3x64xf32>, vector<3x64xf32>, vector<3x64xf32> -> vector<3x256xf32>
    %97 = arith.truncf %96 : vector<3x256xf32> to vector<3x256xbf16>
    %c0_63 = arith.constant 0 : index
    %c0_64 = arith.constant 0 : index
    %98 = vector.load %arg13[%c0_63, %c0_64] : memref<256x256xbf16, #tpu.memory_space<vmem>>, vector<256x256xbf16>
    %cst_65 = arith.constant dense<0.000000e+00> : vector<3x256xf32>
    %99 = tpu.matmul %97, %98, %cst_65 {dimension_numbers = #tpu.dot_dimension_numbers<[1], [0], [0], [1], [0, 0, 1, 1], [], []>} : vector<3x256xbf16>, vector<256x256xbf16>, vector<3x256xf32> -> vector<3x256xf32>
    %c0_66 = arith.constant 0 : index
    %c0_67 = arith.constant 0 : index
    %100 = vector.load %arg12[%c0_66, %c0_67] : memref<3x1xf32, #tpu.memory_space<vmem>>, vector<3x1xf32>
    %101 = vector.broadcast %100 : vector<3x1xf32> to vector<3x256xf32>
    %102 = arith.addf %99, %101 : vector<3x256xf32>
    %103 = math.absf %102 : vector<3x256xf32>
    %cst_68 = arith.constant 0.000000e+00 : f32
    %104 = vector.broadcast %cst_68 : f32 to vector<3x256xf32>
    %105 = arith.subf %104, %103 : vector<3x256xf32>
    %106 = math.exp %105 : vector<3x256xf32>
    %cst_69 = arith.constant 1.000000e+00 : f32
    %107 = vector.broadcast %cst_69 : f32 to vector<3x256xf32>
    %108 = arith.addf %107, %106 : vector<3x256xf32>
    %109 = tpu.reciprocal %108 {approx = true} : vector<3x256xf32> -> vector<3x256xf32>
    %cst_70 = arith.constant 0.000000e+00 : f32
    %110 = vector.broadcast %cst_70 : f32 to vector<3x256xf32>
    %111 = arith.cmpf oge, %102, %110 : vector<3x256xf32>
    %112 = arith.mulf %106, %109 : vector<3x256xf32>
    %113 = arith.select %111, %109, %112 : vector<3x256xi1>, vector<3x256xf32>
    %c0_71 = arith.constant 0 : index
    %c0_72 = arith.constant 0 : index
    %c0_73 = arith.constant 0 : index
    %114 = vector.load %arg14[%c0_71, %c0_72, %c0_73] : memref<1x3x256xf32, #tpu.memory_space<vmem>>, vector<1x3x256xf32>
    %115 = vector.shape_cast %114 : vector<1x3x256xf32> to vector<3x256xf32>
    %116 = vector.shape_cast %113 : vector<3x256xf32> to vector<1x3x256xf32>
    tpu.vector_store %arg14[%c0_71, %c0_72, %c0_73], %116 {strides = array<i32>} : memref<1x3x256xf32, #tpu.memory_space<vmem>>, vector<1x3x256xf32>,
    return
  }
  func.func @transform_0(%arg0: i32) -> (i32, i32, i32) {
    %c0_i32 = arith.constant 0 : i32
    %c0_i32_0 = arith.constant 0 : i32
    %c0_i32_1 = arith.constant 0 : i32
    return %arg0, %c0_i32, %c0_i32_0 : i32, i32, i32
  }
  func.func @transform_1(%arg0: i32) -> (i32, i32) {
    %c0_i32 = arith.constant 0 : i32
    %c0_i32_0 = arith.constant 0 : i32
    %c0_i32_1 = arith.constant 0 : i32
    return %c0_i32, %c0_i32_0 : i32, i32
  }
  func.func @transform_2(%arg0: i32) -> (i32, i32) {
    %c0_i32 = arith.constant 0 : i32
    %c0_i32_0 = arith.constant 0 : i32
    %c0_i32_1 = arith.constant 0 : i32
    return %c0_i32, %c0_i32_0 : i32, i32
  }
  func.func @transform_3(%arg0: i32) -> (i32, i32) {
    %c0_i32 = arith.constant 0 : i32
    %c0_i32_0 = arith.constant 0 : i32
    %c0_i32_1 = arith.constant 0 : i32
    return %c0_i32, %c0_i32_0 : i32, i32
  }
  func.func @transform_4(%arg0: i32) -> (i32, i32) {
    %c0_i32 = arith.constant 0 : i32
    %c0_i32_0 = arith.constant 0 : i32
    %c0_i32_1 = arith.constant 0 : i32
    return %c0_i32, %c0_i32_0 : i32, i32
  }
  func.func @transform_5(%arg0: i32) -> (i32, i32) {
    %c0_i32 = arith.constant 0 : i32
    %c0_i32_0 = arith.constant 0 : i32
    %c0_i32_1 = arith.constant 0 : i32
    return %c0_i32, %c0_i32_0 : i32, i32
  }
  func.func @transform_6(%arg0: i32) -> (i32, i32) {
    %c0_i32 = arith.constant 0 : i32
    %c0_i32_0 = arith.constant 0 : i32
    %c0_i32_1 = arith.constant 0 : i32
    return %c0_i32, %c0_i32_0 : i32, i32
  }
  func.func @transform_7(%arg0: i32) -> (i32, i32) {
    %c0_i32 = arith.constant 0 : i32
    %c0_i32_0 = arith.constant 0 : i32
    %c0_i32_1 = arith.constant 0 : i32
    return %c0_i32, %c0_i32_0 : i32, i32
  }
  func.func @transform_8(%arg0: i32) -> (i32, i32) {
    %c0_i32 = arith.constant 0 : i32
    %c0_i32_0 = arith.constant 0 : i32
    %c0_i32_1 = arith.constant 0 : i32
    return %c0_i32, %c0_i32_0 : i32, i32
  }
  func.func @transform_9(%arg0: i32) -> (i32, i32) {
    %c0_i32 = arith.constant 0 : i32
    %c0_i32_0 = arith.constant 0 : i32
    %c0_i32_1 = arith.constant 0 : i32
    return %c0_i32, %c0_i32_0 : i32, i32
  }
  func.func @transform_10(%arg0: i32) -> (i32, i32) {
    %c0_i32 = arith.constant 0 : i32
    %c0_i32_0 = arith.constant 0 : i32
    %c0_i32_1 = arith.constant 0 : i32
    return %c0_i32, %c0_i32_0 : i32, i32
  }
  func.func @transform_11(%arg0: i32) -> (i32, i32) {
    %c0_i32 = arith.constant 0 : i32
    %c0_i32_0 = arith.constant 0 : i32
    %c0_i32_1 = arith.constant 0 : i32
    return %c0_i32, %c0_i32_0 : i32, i32
  }
  func.func @transform_12(%arg0: i32) -> (i32, i32) {
    %c0_i32 = arith.constant 0 : i32
    %c0_i32_0 = arith.constant 0 : i32
    %c0_i32_1 = arith.constant 0 : i32
    return %c0_i32, %c0_i32_0 : i32, i32
  }
  func.func @transform_13(%arg0: i32) -> (i32, i32, i32) {
    %c0_i32 = arith.constant 0 : i32
    %c0_i32_0 = arith.constant 0 : i32
    %c0_i32_1 = arith.constant 0 : i32
    return %arg0, %c0_i32, %c0_i32_0 : i32, i32, i32
  }
}

</mosaic_0001>

<llo_original>
// kernel: conv_autoencoder_forward.1
$region0: #{conv_autoencoder_forward.1}
  #allocation0 [shape = 'u32[]', space=smem, size = 0x4, offset = 0x4, fixed_abs, tag = 'smem constant byte address 0x4 - core index']
  #allocation1 [shape = 'u32[144,128]{1,0:T(1,128)}', space=vmem, size = 0x12000, scoped, tag = 'internal scratch']
  #allocation2 [shape = 'bf16[144,286]{1,0:T(8,128)(2,1)}', space=vmem, size = 0x1b000, scoped, tag = 'scratch operand']
  #allocation3 [shape = 'bf16[144,78]{1,0:T(8,128)(2,1)}', space=vmem, size = 0x9000, scoped, tag = 'scratch operand']
  %s0 = inlined_call_operand.vmem [shape: bf16[2,16,324], index: 0, kind: input, shape index: {}]
  %s1 = inlined_call_operand.vmem [shape: bf16[16,144], index: 1, kind: input, shape index: {}]
  %s2 = inlined_call_operand.vmem [shape: f32[16,1], index: 2, kind: input, shape index: {}]
  %s3 = inlined_call_operand.vmem [shape: bf16[267,100], index: 3, kind: input, shape index: {}]
  %s4 = inlined_call_operand.vmem [shape: bf16[32,144], index: 4, kind: input, shape index: {}]
  %s5 = inlined_call_operand.vmem [shape: f32[32,1], index: 5, kind: input, shape index: {}]
  %s6 = inlined_call_operand.vmem [shape: bf16[67,16], index: 6, kind: input, shape index: {}]
  %s7 = inlined_call_operand.vmem [shape: bf16[64,32], index: 7, kind: input, shape index: {}]
  %s8 = inlined_call_operand.vmem [shape: f32[16,1], index: 8, kind: input, shape index: {}]
  %s9 = inlined_call_operand.vmem [shape: bf16[64,64], index: 9, kind: input, shape index: {}]
  %s10 = inlined_call_operand.vmem [shape: bf16[32,16], index: 10, kind: input, shape index: {}]
  %s11 = inlined_call_operand.vmem [shape: f32[3,1], index: 11, kind: input, shape index: {}]
  %s12 = inlined_call_operand.vmem [shape: bf16[256,256], index: 12, kind: input, shape index: {}]
  %s13 = inlined_call_operand.vmem [shape: f32[2,3,256], index: 13, kind: output, shape index: {}]
  %s14 = sld [smem:[#allocation0]]
  $region85: #{conv_autoencoder_forward.1} parent=0
    _
  %s16 = ssub.s32 1, %s14
  %s17 = scalar_select 0, %s16, %s14
  loop: start=0, step=1, limit=4
  $region2: #{conv_autoencoder_forward.1} parent=0 // loop_pre_header
    _
  $region3: #{conv_autoencoder_forward.1} parent=0 // loop_header
    %s19 = sphi 0, %s23
    %p20 = scmp.ge.s32.totalorder %s19, 4
    %s29 = sphi 0, %s31
    %s32 = sphi 0, %s29
    %s33 = sphi 0, %s32
    %s49 = sphi 0, %s33
    %s53 = sphi 0, %s53
    %s55 = sphi 0, %s53
    %s56 = sphi 0, %s55
    %s70 = sphi 0, %s56
    %s74 = sphi 0, %s74
    %s76 = sphi 0, %s74
    %s77 = sphi 0, %s76
    %s91 = sphi 0, %s77
    %s95 = sphi 0, %s95
    %s97 = sphi 0, %s95
    %s98 = sphi 0, %s97
    %s112 = sphi 0, %s98
    %s116 = sphi 0, %s116
    %s118 = sphi 0, %s116
    %s119 = sphi 0, %s118
    %s133 = sphi 0, %s119
    %s137 = sphi 0, %s137
    %s139 = sphi 0, %s137
    %s140 = sphi 0, %s139
    %s154 = sphi 0, %s140
    %s158 = sphi 0, %s158
    %s160 = sphi 0, %s158
    %s161 = sphi 0, %s160
    %s175 = sphi 0, %s161
    %s179 = sphi 0, %s179
    %s181 = sphi 0, %s179
    %s182 = sphi 0, %s181
    %s196 = sphi 0, %s182
    %s200 = sphi 0, %s200
    %s202 = sphi 0, %s200
    %s203 = sphi 0, %s202
    %s217 = sphi 0, %s203
    %s221 = sphi 0, %s221
    %s223 = sphi 0, %s221
    %s224 = sphi 0, %s223
    %s238 = sphi 0, %s224
    %s242 = sphi 0, %s242
    %s244 = sphi 0, %s242
    %s245 = sphi 0, %s244
    %s259 = sphi 0, %s245
    %s263 = sphi 0, %s263
    %s265 = sphi 0, %s263
    %s266 = sphi 0, %s265
    %s280 = sphi 0, %s266
    %s284 = sphi 0, %s284
    %s286 = sphi 0, %s284
    %s287 = sphi 0, %s286
    %s301 = sphi 0, %s287
    %s307 = sphi 0, %s309
    %s310 = sphi 0, %s307
    %s311 = sphi 0, %s310
    %s327 = sphi 0, %s311
  $region4: #{conv_autoencoder_forward.1} parent=0 // loop_header_branch
    %22 = sbr.rel (%p20) target = $region8
  $region5: #{conv_autoencoder_forward.1} parent=0 // loop_body
    %s24 = ssub.s32 %s19, 1
    %s25 = ssub.s32 %s19, 2
    %s26 = sadd.s32 %s19, 1
    %s27 = ssub.s32 %s19, %s26
    %p28 = scmp.eq.s32.totalorder %s27, 0
    %s30 = sadd.s32 %s29, 1
    %s31 = scalar_select %p28, %s29, %s30
    %p34 = pneg %p28
    %p35 = scmp.eq.s32.totalorder %s19, 1
    %p36 = por %p34, %p35
    %p37 = scmp.ne.s32.totalorder %s29, %s32
    %p38 = scmp.eq.s32.totalorder %s19, 0
    %p39 = por %p37, %p38
    %p40 = scmp.ne.s32.totalorder %s29, %s32
    %p41 = scmp.eq.s32.totalorder %s24, 1
    %p42 = por %p40, %p41
    %p43 = scmp.ne.s32.totalorder %s32, %s33
    %p44 = scmp.eq.s32.totalorder %s24, 0
    %p45 = por %p43, %p44
    %p46 = scmp.ne.s32.totalorder %s32, %s33
    %p47 = scmp.eq.s32.totalorder %s25, 1
    %p48 = por %p46, %p47
    %p50 = scmp.ne.s32.totalorder %s33, %s49
    %p51 = scmp.eq.s32.totalorder %s25, 0
    %p52 = por %p50, %p51
    %s54 = sadd.s32 %s53, 1
    %p57 = scmp.eq.s32.totalorder %s19, 1
    %p58 = scmp.ne.s32.totalorder %s53, %s55
    %p59 = scmp.eq.s32.totalorder %s19, 0
    %p60 = por %p58, %p59
    %p61 = scmp.ne.s32.totalorder %s53, %s55
    %p62 = scmp.eq.s32.totalorder %s24, 1
    %p63 = por %p61, %p62
    %p64 = scmp.ne.s32.totalorder %s55, %s56
    %p65 = scmp.eq.s32.totalorder %s24, 0
    %p66 = por %p64, %p65
    %p67 = scmp.ne.s32.totalorder %s55, %s56
    %p68 = scmp.eq.s32.totalorder %s25, 1
    %p69 = por %p67, %p68
    %p71 = scmp.ne.s32.totalorder %s56, %s70
    %p72 = scmp.eq.s32.totalorder %s25, 0
    %p73 = por %p71, %p72
    %s75 = sadd.s32 %s74, 1
    %p78 = scmp.eq.s32.totalorder %s19, 1
    %p79 = scmp.ne.s32.totalorder %s74, %s76
    %p80 = scmp.eq.s32.totalorder %s19, 0
    %p81 = por %p79, %p80
    %p82 = scmp.ne.s32.totalorder %s74, %s76
    %p83 = scmp.eq.s32.totalorder %s24, 1
    %p84 = por %p82, %p83
    %p85 = scmp.ne.s32.totalorder %s76, %s77
    %p86 = scmp.eq.s32.totalorder %s24, 0
    %p87 = por %p85, %p86
    %p88 = scmp.ne.s32.totalorder %s76, %s77
    %p89 = scmp.eq.s32.totalorder %s25, 1
    %p90 = por %p88, %p89
    %p92 = scmp.ne.s32.totalorder %s77, %s91
    %p93 = scmp.eq.s32.totalorder %s25, 0
    %p94 = por %p92, %p93
    %s96 = sadd.s32 %s95, 1
    %p99 = scmp.eq.s32.totalorder %s19, 1
    %p100 = scmp.ne.s32.totalorder %s95, %s97
    %p101 = scmp.eq.s32.totalorder %s19, 0
    %p102 = por %p100, %p101
    %p103 = scmp.ne.s32.totalorder %s95, %s97
    %p104 = scmp.eq.s32.totalorder %s24, 1
    %p105 = por %p103, %p104
    %p106 = scmp.ne.s32.totalorder %s97, %s98
    %p107 = scmp.eq.s32.totalorder %s24, 0
    %p108 = por %p106, %p107
    %p109 = scmp.ne.s32.totalorder %s97, %s98
    %p110 = scmp.eq.s32.totalorder %s25, 1
    %p111 = por %p109, %p110
    %p113 = scmp.ne.s32.totalorder %s98, %s112
    %p114 = scmp.eq.s32.totalorder %s25, 0
    %p115 = por %p113, %p114
    %s117 = sadd.s32 %s116, 1
    %p120 = scmp.eq.s32.totalorder %s19, 1
    %p121 = scmp.ne.s32.totalorder %s116, %s118
    %p122 = scmp.eq.s32.totalorder %s19, 0
    %p123 = por %p121, %p122
    %p124 = scmp.ne.s32.totalorder %s116, %s118
    %p125 = scmp.eq.s32.totalorder %s24, 1
    %p126 = por %p124, %p125
    %p127 = scmp.ne.s32.totalorder %s118, %s119
    %p128 = scmp.eq.s32.totalorder %s24, 0
    %p129 = por %p127, %p128
    %p130 = scmp.ne.s32.totalorder %s118, %s119
    %p131 = scmp.eq.s32.totalorder %s25, 1
    %p132 = por %p130, %p131
    %p134 = scmp.ne.s32.totalorder %s119, %s133
    %p135 = scmp.eq.s32.totalorder %s25, 0
    %p136 = por %p134, %p135
    %s138 = sadd.s32 %s137, 1
    %p141 = scmp.eq.s32.totalorder %s19, 1
    %p142 = scmp.ne.s32.totalorder %s137, %s139
    %p143 = scmp.eq.s32.totalorder %s19, 0
    %p144 = por %p142, %p143
    %p145 = scmp.ne.s32.totalorder %s137, %s139
    %p146 = scmp.eq.s32.totalorder %s24, 1
    %p147 = por %p145, %p146
    %p148 = scmp.ne.s32.totalorder %s139, %s140
    %p149 = scmp.eq.s32.totalorder %s24, 0
    %p150 = por %p148, %p149
    %p151 = scmp.ne.s32.totalorder %s139, %s140
    %p152 = scmp.eq.s32.totalorder %s25, 1
    %p153 = por %p151, %p152
    %p155 = scmp.ne.s32.totalorder %s140, %s154
    %p156 = scmp.eq.s32.totalorder %s25, 0
    %p157 = por %p155, %p156
    %s159 = sadd.s32 %s158, 1
    %p162 = scmp.eq.s32.totalorder %s19, 1
    %p163 = scmp.ne.s32.totalorder %s158, %s160
    %p164 = scmp.eq.s32.totalorder %s19, 0
    %p165 = por %p163, %p164
    %p166 = scmp.ne.s32.totalorder %s158, %s160
    %p167 = scmp.eq.s32.totalorder %s24, 1
    %p168 = por %p166, %p167
    %p169 = scmp.ne.s32.totalorder %s160, %s161
    %p170 = scmp.eq.s32.totalorder %s24, 0
    %p171 = por %p169, %p170
    %p172 = scmp.ne.s32.totalorder %s160, %s161
    %p173 = scmp.eq.s32.totalorder %s25, 1
    %p174 = por %p172, %p173
    %p176 = scmp.ne.s32.totalorder %s161, %s175
    %p177 = scmp.eq.s32.totalorder %s25, 0
    %p178 = por %p176, %p177
    %s180 = sadd.s32 %s179, 1
    %p183 = scmp.eq.s32.totalorder %s19, 1
    %p184 = scmp.ne.s32.totalorder %s179, %s181
    %p185 = scmp.eq.s32.totalorder %s19, 0
    %p186 = por %p184, %p185
    %p187 = scmp.ne.s32.totalorder %s179, %s181
    %p188 = scmp.eq.s32.totalorder %s24, 1
    %p189 = por %p187, %p188
    %p190 = scmp.ne.s32.totalorder %s181, %s182
    %p191 = scmp.eq.s32.totalorder %s24, 0
    %p192 = por %p190, %p191
    %p193 = scmp.ne.s32.totalorder %s181, %s182
    %p194 = scmp.eq.s32.totalorder %s25, 1
    %p195 = por %p193, %p194
    %p197 = scmp.ne.s32.totalorder %s182, %s196
    %p198 = scmp.eq.s32.totalorder %s25, 0
    %p199 = por %p197, %p198
    %s201 = sadd.s32 %s200, 1
    %p204 = scmp.eq.s32.totalorder %s19, 1
    %p205 = scmp.ne.s32.totalorder %s200, %s202
    %p206 = scmp.eq.s32.totalorder %s19, 0
    %p207 = por %p205, %p206
    %p208 = scmp.ne.s32.totalorder %s200, %s202
    %p209 = scmp.eq.s32.totalorder %s24, 1
    %p210 = por %p208, %p209
    %p211 = scmp.ne.s32.totalorder %s202, %s203
    %p212 = scmp.eq.s32.totalorder %s24, 0
    %p213 = por %p211, %p212
    %p214 = scmp.ne.s32.totalorder %s202, %s203
    %p215 = scmp.eq.s32.totalorder %s25, 1
    %p216 = por %p214, %p215
    %p218 = scmp.ne.s32.totalorder %s203, %s217
    %p219 = scmp.eq.s32.totalorder %s25, 0
    %p220 = por %p218, %p219
    %s222 = sadd.s32 %s221, 1
    %p225 = scmp.eq.s32.totalorder %s19, 1
    %p226 = scmp.ne.s32.totalorder %s221, %s223
    %p227 = scmp.eq.s32.totalorder %s19, 0
    %p228 = por %p226, %p227
    %p229 = scmp.ne.s32.totalorder %s221, %s223
    %p230 = scmp.eq.s32.totalorder %s24, 1
    %p231 = por %p229, %p230
    %p232 = scmp.ne.s32.totalorder %s223, %s224
    %p233 = scmp.eq.s32.totalorder %s24, 0
    %p234 = por %p232, %p233
    %p235 = scmp.ne.s32.totalorder %s223, %s224
    %p236 = scmp.eq.s32.totalorder %s25, 1
    %p237 = por %p235, %p236
    %p239 = scmp.ne.s32.totalorder %s224, %s238
    %p240 = scmp.eq.s32.totalorder %s25, 0
    %p241 = por %p239, %p240
    %s243 = sadd.s32 %s242, 1
    %p246 = scmp.eq.s32.totalorder %s19, 1
    %p247 = scmp.ne.s32.totalorder %s242, %s244
    %p248 = scmp.eq.s32.totalorder %s19, 0
    %p249 = por %p247, %p248
    %p250 = scmp.ne.s32.totalorder %s242, %s244
    %p251 = scmp.eq.s32.totalorder %s24, 1
    %p252 = por %p250, %p251
    %p253 = scmp.ne.s32.totalorder %s244, %s245
    %p254 = scmp.eq.s32.totalorder %s24, 0
    %p255 = por %p253, %p254
    %p256 = scmp.ne.s32.totalorder %s244, %s245
    %p257 = scmp.eq.s32.totalorder %s25, 1
    %p258 = por %p256, %p257
    %p260 = scmp.ne.s32.totalorder %s245, %s259
    %p261 = scmp.eq.s32.totalorder %s25, 0
    %p262 = por %p260, %p261
    %s264 = sadd.s32 %s263, 1
    %p267 = scmp.eq.s32.totalorder %s19, 1
    %p268 = scmp.ne.s32.totalorder %s263, %s265
    %p269 = scmp.eq.s32.totalorder %s19, 0
    %p270 = por %p268, %p269
    %p271 = scmp.ne.s32.totalorder %s263, %s265
    %p272 = scmp.eq.s32.totalorder %s24, 1
    %p273 = por %p271, %p272
    %p274 = scmp.ne.s32.totalorder %s265, %s266
    %p275 = scmp.eq.s32.totalorder %s24, 0
    %p276 = por %p274, %p275
    %p277 = scmp.ne.s32.totalorder %s265, %s266
    %p278 = scmp.eq.s32.totalorder %s25, 1
    %p279 = por %p277, %p278
    %p281 = scmp.ne.s32.totalorder %s266, %s280
    %p282 = scmp.eq.s32.totalorder %s25, 0
    %p283 = por %p281, %p282
    %s285 = sadd.s32 %s284, 1
    %p288 = scmp.eq.s32.totalorder %s19, 1
    %p289 = scmp.ne.s32.totalorder %s284, %s286
    %p290 = scmp.eq.s32.totalorder %s19, 0
    %p291 = por %p289, %p290
    %p292 = scmp.ne.s32.totalorder %s284, %s286
    %p293 = scmp.eq.s32.totalorder %s24, 1
    %p294 = por %p292, %p293
    %p295 = scmp.ne.s32.totalorder %s286, %s287
    %p296 = scmp.eq.s32.totalorder %s24, 0
    %p297 = por %p295, %p296
    %p298 = scmp.ne.s32.totalorder %s286, %s287
    %p299 = scmp.eq.s32.totalorder %s25, 1
    %p300 = por %p298, %p299
    %p302 = scmp.ne.s32.totalorder %s287, %s301
    %p303 = scmp.eq.s32.totalorder %s25, 0
    %p304 = por %p302, %p303
    %s305 = ssub.s32 %s19, %s26
    %p306 = scmp.eq.s32.totalorder %s305, 0
    %s308 = sadd.s32 %s307, 1
    %s309 = scalar_select %p306, %s307, %s308
    %p312 = pneg %p306
    %p313 = scmp.eq.s32.totalorder %s19, 1
    %p314 = por %p312, %p313
    %p315 = scmp.ne.s32.totalorder %s307, %s310
    %p316 = scmp.eq.s32.totalorder %s19, 0
    %p317 = por %p315, %p316
    %p318 = scmp.ne.s32.totalorder %s307, %s310
    %p319 = scmp.eq.s32.totalorder %s24, 1
    %p320 = por %p318, %p319
    %p321 = scmp.ne.s32.totalorder %s310, %s311
    %p322 = scmp.eq.s32.totalorder %s24, 0
    %p323 = por %p321, %p322
    %p324 = scmp.ne.s32.totalorder %s310, %s311
    %p325 = scmp.eq.s32.totalorder %s25, 1
    %p326 = por %p324, %p325
    %p328 = scmp.ne.s32.totalorder %s311, %s327
    %p329 = scmp.eq.s32.totalorder %s25, 0
    %p330 = por %p328, %p329
    %p331 = scmp.le.s32.totalorder 1, %s19
    %p332 = scmp.lt.s32.totalorder %s19, 3
    %p333 = pnand %p331, %p332
    %p334 = pneg %p333
    // Predicated region
    $region9: #{conv_autoencoder_forward.1} parent=5 // pred_check
      _
    $region10: #{conv_autoencoder_forward.1} parent=5 // pred_check_branch
      %336 = sbr.rel (%p333) target = $region12
    $region11: #{conv_autoencoder_forward.1} parent=5 // pred_region
      %s337 = ssub.s32 %s19, 1
      // Predicated region
      $region13: #{conv_autoencoder_forward.1} parent=11 // pred_check
        %p338 = pneg %p66
      $region14: #{conv_autoencoder_forward.1} parent=11 // pred_check_branch
        %340 = sbr.rel (%p338) target = $region16
      $region15: #{conv_autoencoder_forward.1} parent=11 // pred_region
        _
      $region16: #{conv_autoencoder_forward.1} parent=11 // pred_fallthru
        _
      // Predicated region
      $region17: #{conv_autoencoder_forward.1} parent=11 // pred_check
        %p341 = pneg %p87
      $region18: #{conv_autoencoder_forward.1} parent=11 // pred_check_branch
        %343 = sbr.rel (%p341) target = $region20
      $region19: #{conv_autoencoder_forward.1} parent=11 // pred_region
        _
      $region20: #{conv_autoencoder_forward.1} parent=11 // pred_fallthru
        _
      // Predicated region
      $region21: #{conv_autoencoder_forward.1} parent=11 // pred_check
        %p344 = pneg %p108
      $region22: #{conv_autoencoder_forward.1} parent=11 // pred_check_branch
        %346 = sbr.rel (%p344) target = $region24
      $region23: #{conv_autoencoder_forward.1} parent=11 // pred_region
        _
      $region24: #{conv_autoencoder_forward.1} parent=11 // pred_fallthru
        _
      // Predicated region
      $region25: #{conv_autoencoder_forward.1} parent=11 // pred_check
        %p347 = pneg %p129
      $region26: #{conv_autoencoder_forward.1} parent=11 // pred_check_branch
        %349 = sbr.rel (%p347) target = $region28
      $region27: #{conv_autoencoder_forward.1} parent=11 // pred_region
        _
      $region28: #{conv_autoencoder_forward.1} parent=11 // pred_fallthru
        _
      // Predicated region
      $region29: #{conv_autoencoder_forward.1} parent=11 // pred_check
        %p350 = pneg %p150
      $region30: #{conv_autoencoder_forward.1} parent=11 // pred_check_branch
        %352 = sbr.rel (%p350) target = $region32
      $region31: #{conv_autoencoder_forward.1} parent=11 // pred_region
        _
      $region32: #{conv_autoencoder_forward.1} parent=11 // pred_fallthru
        _
      // Predicated region
      $region33: #{conv_autoencoder_forward.1} parent=11 // pred_check
        %p353 = pneg %p171
      $region34: #{conv_autoencoder_forward.1} parent=11 // pred_check_branch
        %355 = sbr.rel (%p353) target = $region36
      $region35: #{conv_autoencoder_forward.1} parent=11 // pred_region
        _
      $region36: #{conv_autoencoder_forward.1} parent=11 // pred_fallthru
        _
      // Predicated region
      $region37: #{conv_autoencoder_forward.1} parent=11 // pred_check
        %p356 = pneg %p192
      $region38: #{conv_autoencoder_forward.1} parent=11 // pred_check_branch
        %358 = sbr.rel (%p356) target = $region40
      $region39: #{conv_autoencoder_forward.1} parent=11 // pred_region
        _
      $region40: #{conv_autoencoder_forward.1} parent=11 // pred_fallthru
        _
      // Predicated region
      $region41: #{conv_autoencoder_forward.1} parent=11 // pred_check
        %p359 = pneg %p213
      $region42: #{conv_autoencoder_forward.1} parent=11 // pred_check_branch
        %361 = sbr.rel (%p359) target = $region44
      $region43: #{conv_autoencoder_forward.1} parent=11 // pred_region
        _
      $region44: #{conv_autoencoder_forward.1} parent=11 // pred_fallthru
        _
      // Predicated region
      $region45: #{conv_autoencoder_forward.1} parent=11 // pred_check
        %p362 = pneg %p234
      $region46: #{conv_autoencoder_forward.1} parent=11 // pred_check_branch
        %364 = sbr.rel (%p362) target = $region48
      $region47: #{conv_autoencoder_forward.1} parent=11 // pred_region
        _
      $region48: #{conv_autoencoder_forward.1} parent=11 // pred_fallthru
        _
      // Predicated region
      $region49: #{conv_autoencoder_forward.1} parent=11 // pred_check
        %p365 = pneg %p255
      $region50: #{conv_autoencoder_forward.1} parent=11 // pred_check_branch
        %367 = sbr.rel (%p365) target = $region52
      $region51: #{conv_autoencoder_forward.1} parent=11 // pred_region
        _
      $region52: #{conv_autoencoder_forward.1} parent=11 // pred_fallthru
        _
      // Predicated region
      $region53: #{conv_autoencoder_forward.1} parent=11 // pred_check
        %p368 = pneg %p276
      $region54: #{conv_autoencoder_forward.1} parent=11 // pred_check_branch
        %370 = sbr.rel (%p368) target = $region56
      $region55: #{conv_autoencoder_forward.1} parent=11 // pred_region
        _
      $region56: #{conv_autoencoder_forward.1} parent=11 // pred_fallthru
        _
      // Predicated region
      $region57: #{conv_autoencoder_forward.1} parent=11 // pred_check
        %p371 = pneg %p297
      $region58: #{conv_autoencoder_forward.1} parent=11 // pred_check_branch
        %373 = sbr.rel (%p371) target = $region60
      $region59: #{conv_autoencoder_forward.1} parent=11 // pred_region
        _
      $region60: #{conv_autoencoder_forward.1} parent=11 // pred_fallthru
        _
    $region12: #{conv_autoencoder_forward.1} parent=5 // pred_fallthru
      _
    %p374 = scmp.lt.s32.totalorder %s19, 2
    // Predicated region
    $region61: #{conv_autoencoder_forward.1} parent=5 // pred_check
      %p375 = pneg %p374
    $region62: #{conv_autoencoder_forward.1} parent=5 // pred_check_branch
      %377 = sbr.rel (%p375) target = $region64
    $region63: #{conv_autoencoder_forward.1} parent=5 // pred_region
      // Predicated region
      $region65: #{conv_autoencoder_forward.1} parent=63 // pred_check
        %p378 = pneg %p39
      $region66: #{conv_autoencoder_forward.1} parent=63 // pred_check_branch
        %380 = sbr.rel (%p378) target = $region68
      $region67: #{conv_autoencoder_forward.1} parent=63 // pred_region
        %p381 = scmp.lt.s32.totalorder %s19, 1
        %s382 = scalar_select %p381, %s19, 1
        %s383 = smul.addr %s382, 6
        %s384 = smul.addr %s383, 4
        %s385 = scalar_lea.vmem %s0, %s384
      $region68: #{conv_autoencoder_forward.1} parent=63 // pred_fallthru
        _
    $region64: #{conv_autoencoder_forward.1} parent=5 // pred_fallthru
      _
    %p386 = scmp.le.s32.totalorder 1, %s19
    %p387 = scmp.lt.s32.totalorder %s19, 3
    %p388 = pnand %p386, %p387
    %p389 = pneg %p388
    // Predicated region
    $region69: #{conv_autoencoder_forward.1} parent=5 // pred_check
      _
    $region70: #{conv_autoencoder_forward.1} parent=5 // pred_check_branch
      %391 = sbr.rel (%p388) target = $region72
    $region71: #{conv_autoencoder_forward.1} parent=5 // pred_region
      %s392 = ssub.s32 %s19, 1
      %p393 = scmp.lt.s32.totalorder %s24, 1
      %s394 = scalar_select %p393, %s24, 1
      %s395 = smul.addr %s394, 6
      %s396 = smul.addr %s395, 4
      %s397 = scalar_lea.vmem %s0, %s396
      %p398 = pneg %p45
      %p399 = pneg %p42
      %p400 = pneg %p66
      %p401 = pneg %p63
      %p402 = pneg %p87
      %p403 = pneg %p84
      %p404 = pneg %p108
      %p405 = pneg %p105
      %p406 = pneg %p129
      %p407 = pneg %p126
      %p408 = pneg %p150
      %p409 = pneg %p147
      %p410 = pneg %p171
      %p411 = pneg %p168
      %p412 = pneg %p192
      %p413 = pneg %p189
      %p414 = pneg %p213
      %p415 = pneg %p210
      %p416 = pneg %p234
      %p417 = pneg %p231
      %p418 = pneg %p255
      %p419 = pneg %p252
      %p420 = pneg %p276
      %p421 = pneg %p273
      %p422 = pneg %p297
      %p423 = pneg %p294
      %p424 = pneg %p323
      %p425 = pneg %p320
      %p426 = scmp.lt.s32.totalorder %s24, 1
      %s427 = scalar_select %p426, %s24, 1
      %s428 = smul.addr %s427, 2
      %s429 = smul.addr %s428, 4
      %s430 = scalar_lea.vmem %s13, %s429
      %p431 = scmp.lt.s32.totalorder %s24, 1
      %s432 = scalar_select %p431, %s24, 1
      %s433 = smul.addr %s432, 6
      %s434 = smul.addr %s433, 4
      %s435 = scalar_lea.vmem %s0, %s434
      %p436 = scmp.lt.s32.totalorder %s24, 1
      %s437 = scalar_select %p436, %s24, 1
      %s438 = smul.addr %s437, 2
      %s439 = smul.addr %s438, 4
      %s440 = scalar_lea.vmem %s13, %s439
      %v442 = vld [vmem:[%s435] sm:$0xff]
      %v443 = vld [vmem:[%s435 + $0x8] sm:$0xf]
      %v444 = vld [vmem:[%s435 + $0xc] sm:$0xff]
      %v445 = vld [vmem:[%s435 + $0x14] sm:$0xf]
      %446 = vst [vmem:[#allocation2] sm:$0xff] %v442
      %vm447 = vcmask 240640
      %448 = vst.msk [vmem:[#allocation2 + $0x8] sm:$0xf] %vm447, %v443
      %449 = vst [vmem:[#allocation2 + $0xc] sm:$0xff] %v444
      %450 = vst.msk [vmem:[#allocation2 + $0x14] sm:$0xf] %vm447, %v445
      %455 = vrot.lane.b32.xlu0 %v442, 127
      %v456 = vpop.permute.xlu0 %455
      %457 = vrot.lane.b32.xlu0 %v443, 127
      %v458 = vpop.permute.xlu0 %457
      %459 = vrot.lane.b32.xlu0 %v444, 127
      %v460 = vpop.permute.xlu0 %459
      %461 = vrot.lane.b32.xlu0 %v445, 127
      %v462 = vpop.permute.xlu0 %461
      %v463 = vrot.slane %v456, 4
      %v464 = vrot.slane %v458, 4
      %v465 = vrot.slane %v460, 4
      %v466 = vrot.slane %v462, 4
      %vm467 = vcmask 1043456
      %v468 = vsel %vm467, %v463, %v464
      %vm469 = vcmask 1039360
      %v470 = vsel %vm469, %v456, %v468
      %v471 = vsel %vm467, %v465, %v466
      %v472 = vsel %vm469, %v460, %v471
      %477 = vst [vmem:[#allocation2 + $0x18] sm:$0xff] %v470
      %478 = vst.msk [vmem:[#allocation2 + $0x20] sm:$0xf] %vm447, %v458
      %479 = vst [vmem:[#allocation2 + $0x24] sm:$0xff] %v472
      %480 = vst.msk [vmem:[#allocation2 + $0x2c] sm:$0xf] %vm447, %v462
      %481 = vrot.lane.b32.xlu0 %v442, 126
      %v482 = vpop.permute.xlu0 %481
      %483 = vrot.lane.b32.xlu0 %v443, 126
      %v484 = vpop.permute.xlu0 %483
      %485 = vrot.lane.b32.xlu0 %v444, 126
      %v486 = vpop.permute.xlu0 %485
      %487 = vrot.lane.b32.xlu0 %v445, 126
      %v488 = vpop.permute.xlu0 %487
      %v489 = vrot.slane %v482, 4
      %v490 = vrot.slane %v484, 4
      %v491 = vrot.slane %v486, 4
      %v492 = vrot.slane %v488, 4
      %v493 = vsel %vm467, %v489, %v490
      %vm494 = vcmask 1031168
      %v495 = vsel %vm494, %v482, %v493
      %v496 = vsel %vm467, %v491, %v492
      %v497 = vsel %vm494, %v486, %v496
      %502 = vst [vmem:[#allocation2 + $0x30] sm:$0xff] %v495
      %503 = vst.msk [vmem:[#allocation2 + $0x38] sm:$0xf] %vm447, %v484
      %504 = vst [vmem:[#allocation2 + $0x3c] sm:$0xff] %v497
      %505 = vst.msk [vmem:[#allocation2 + $0x44] sm:$0xf] %vm447, %v488
      %506 = vrot.lane.b32.xlu0 %v442, 110
      %v507 = vpop.permute.xlu0 %506
      %508 = vrot.lane.b32.xlu0 %v443, 110
      %v509 = vpop.permute.xlu0 %508
      %510 = vrot.lane.b32.xlu0 %v444, 110
      %v511 = vpop.permute.xlu0 %510
      %512 = vrot.lane.b32.xlu0 %v445, 110
      %v513 = vpop.permute.xlu0 %512
      %v514 = vrot.slane %v507, 4
      %v515 = vrot.slane %v509, 4
      %v516 = vrot.slane %v511, 4
      %v517 = vrot.slane %v513, 4
      %v518 = vsel %vm467, %v514, %v515
      %vm519 = vcmask 900096
      %v520 = vsel %vm519, %v507, %v518
      %v521 = vsel %vm467, %v516, %v517
      %v522 = vsel %vm519, %v511, %v521
      %527 = vst [vmem:[#allocation2 + $0x48] sm:$0xff] %v520
      %528 = vst.msk [vmem:[#allocation2 + $0x50] sm:$0xf] %vm447, %v509
      %529 = vst [vmem:[#allocation2 + $0x54] sm:$0xff] %v522
      %530 = vst.msk [vmem:[#allocation2 + $0x5c] sm:$0xf] %vm447, %v513
      %531 = vrot.lane.b32.xlu0 %v442, 109
      %v532 = vpop.permute.xlu0 %531
      %533 = vrot.lane.b32.xlu0 %v443, 109
      %v534 = vpop.permute.xlu0 %533
      %535 = vrot.lane.b32.xlu0 %v444, 109
      %v536 = vpop.permute.xlu0 %535
      %537 = vrot.lane.b32.xlu0 %v445, 109
      %v538 = vpop.permute.xlu0 %537
      %v539 = vrot.slane %v532, 4
      %v540 = vrot.slane %v534, 4
      %v541 = vrot.slane %v536, 4
      %v542 = vrot.slane %v538, 4
      %v543 = vsel %vm467, %v539, %v540
      %vm544 = vcmask 891904
      %v545 = vsel %vm544, %v532, %v543
      %v546 = vsel %vm467, %v541, %v542
      %v547 = vsel %vm544, %v536, %v546
      %552 = vst [vmem:[#allocation2 + $0x60] sm:$0xff] %v545
      %553 = vst.msk [vmem:[#allocation2 + $0x68] sm:$0xf] %vm447, %v534
      %554 = vst [vmem:[#allocation2 + $0x6c] sm:$0xff] %v547
      %555 = vst.msk [vmem:[#allocation2 + $0x74] sm:$0xf] %vm447, %v538
      %556 = vrot.lane.b32.xlu0 %v442, 108
      %v557 = vpop.permute.xlu0 %556
      %558 = vrot.lane.b32.xlu0 %v443, 108
      %v559 = vpop.permute.xlu0 %558
      %560 = vrot.lane.b32.xlu0 %v444, 108
      %v561 = vpop.permute.xlu0 %560
      %562 = vrot.lane.b32.xlu0 %v445, 108
      %v563 = vpop.permute.xlu0 %562
      %v564 = vrot.slane %v557, 4
      %v565 = vrot.slane %v559, 4
      %v566 = vrot.slane %v561, 4
      %v567 = vrot.slane %v563, 4
      %v568 = vsel %vm467, %v564, %v565
      %vm569 = vcmask 883712
      %v570 = vsel %vm569, %v557, %v568
      %v571 = vsel %vm467, %v566, %v567
      %v572 = vsel %vm569, %v561, %v571
      %577 = vst [vmem:[#allocation2 + $0x78] sm:$0xff] %v570
      %578 = vst.msk [vmem:[#allocation2 + $0x80] sm:$0xf] %vm447, %v559
      %579 = vst [vmem:[#allocation2 + $0x84] sm:$0xff] %v572
      %580 = vst.msk [vmem:[#allocation2 + $0x8c] sm:$0xf] %vm447, %v563
      %581 = vrot.lane.b32.xlu0 %v442, 92
      %v582 = vpop.permute.xlu0 %581
      %583 = vrot.lane.b32.xlu0 %v443, 92
      %v584 = vpop.permute.xlu0 %583
      %585 = vrot.lane.b32.xlu0 %v444, 92
      %v586 = vpop.permute.xlu0 %585
      %587 = vrot.lane.b32.xlu0 %v445, 92
      %v588 = vpop.permute.xlu0 %587
      %v589 = vrot.slane %v582, 4
      %v590 = vrot.slane %v584, 4
      %v591 = vrot.slane %v586, 4
      %v592 = vrot.slane %v588, 4
      %v593 = vsel %vm467, %v589, %v590
      %vm594 = vcmask 752640
      %v595 = vsel %vm594, %v582, %v593
      %v596 = vsel %vm467, %v591, %v592
      %v597 = vsel %vm594, %v586, %v596
      %602 = vst [vmem:[#allocation2 + $0x90] sm:$0xff] %v595
      %603 = vst.msk [vmem:[#allocation2 + $0x98] sm:$0xf] %vm447, %v584
      %604 = vst [vmem:[#allocation2 + $0x9c] sm:$0xff] %v597
      %605 = vst.msk [vmem:[#allocation2 + $0xa4] sm:$0xf] %vm447, %v588
      %606 = vrot.lane.b32.xlu0 %v442, 91
      %v607 = vpop.permute.xlu0 %606
      %608 = vrot.lane.b32.xlu0 %v443, 91
      %v609 = vpop.permute.xlu0 %608
      %610 = vrot.lane.b32.xlu0 %v444, 91
      %v611 = vpop.permute.xlu0 %610
      %612 = vrot.lane.b32.xlu0 %v445, 91
      %v613 = vpop.permute.xlu0 %612
      %v614 = vrot.slane %v607, 4
      %v615 = vrot.slane %v609, 4
      %v616 = vrot.slane %v611, 4
      %v617 = vrot.slane %v613, 4
      %v618 = vsel %vm467, %v614, %v615
      %vm619 = vcmask 744448
      %v620 = vsel %vm619, %v607, %v618
      %v621 = vsel %vm467, %v616, %v617
      %v622 = vsel %vm619, %v611, %v621
      %627 = vst [vmem:[#allocation2 + $0xa8] sm:$0xff] %v620
      %628 = vst.msk [vmem:[#allocation2 + $0xb0] sm:$0xf] %vm447, %v609
      %629 = vst [vmem:[#allocation2 + $0xb4] sm:$0xff] %v622
      %630 = vst.msk [vmem:[#allocation2 + $0xbc] sm:$0xf] %vm447, %v613
      %631 = vrot.lane.b32.xlu0 %v442, 90
      %v632 = vpop.permute.xlu0 %631
      %633 = vrot.lane.b32.xlu0 %v443, 90
      %v634 = vpop.permute.xlu0 %633
      %635 = vrot.lane.b32.xlu0 %v444, 90
      %v636 = vpop.permute.xlu0 %635
      %637 = vrot.lane.b32.xlu0 %v445, 90
      %v638 = vpop.permute.xlu0 %637
      %v639 = vrot.slane %v632, 4
      %v640 = vrot.slane %v634, 4
      %v641 = vrot.slane %v636, 4
      %v642 = vrot.slane %v638, 4
      %v643 = vsel %vm467, %v639, %v640
      %vm644 = vcmask 736256
      %v645 = vsel %vm644, %v632, %v643
      %v646 = vsel %vm467, %v641, %v642
      %v647 = vsel %vm644, %v636, %v646
      %652 = vst [vmem:[#allocation2 + $0xc0] sm:$0xff] %v645
      %653 = vst.msk [vmem:[#allocation2 + $0xc8] sm:$0xf] %vm447, %v634
      %654 = vst [vmem:[#allocation2 + $0xcc] sm:$0xff] %v647
      %655 = vst.msk [vmem:[#allocation2 + $0xd4] sm:$0xf] %vm447, %v638
      %v656 = vld [vmem:[%s1] sm:$0xff]
      %v657 = vld [vmem:[%s1 + $0x8] sm:$0xff]
      %v658 = vld [vmem:[#allocation2] sm:$0xff]
      %v659 = vld [vmem:[#allocation2 + $0x8] sm:$0xf]
      %v660 = vld [vmem:[#allocation2 + $0xc] sm:$0xff]
      %v661 = vld [vmem:[#allocation2 + $0x14] sm:$0xf]
      %v662 = vld [vmem:[#allocation2 + $0x18] sm:$0xff]
      %v663 = vld [vmem:[#allocation2 + $0x20] sm:$0xf]
      %v664 = vld [vmem:[#allocation2 + $0x24] sm:$0xff]
      %v665 = vld [vmem:[#allocation2 + $0x2c] sm:$0xf]
      %v666 = vld [vmem:[#allocation2 + $0x30] sm:$0xff]
      %v667 = vld [vmem:[#allocation2 + $0x38] sm:$0xf]
      %v668 = vld [vmem:[#allocation2 + $0x3c] sm:$0xff]
      %v669 = vld [vmem:[#allocation2 + $0x44] sm:$0xf]
      %v670 = vld [vmem:[#allocation2 + $0x48] sm:$0xff]
      %v671 = vld [vmem:[#allocation2 + $0x50] sm:$0xf]
      %v672 = vld [vmem:[#allocation2 + $0x54] sm:$0xff]
      %v673 = vld [vmem:[#allocation2 + $0x5c] sm:$0xf]
      %v674 = vld [vmem:[#allocation2 + $0x60] sm:$0xff]
      %v675 = vld [vmem:[#allocation2 + $0x68] sm:$0xf]
      %v676 = vld [vmem:[#allocation2 + $0x6c] sm:$0xff]
      %v677 = vld [vmem:[#allocation2 + $0x74] sm:$0xf]
      %v678 = vld [vmem:[#allocation2 + $0x78] sm:$0xff]
      %v679 = vld [vmem:[#allocation2 + $0x80] sm:$0xf]
      %v680 = vld [vmem:[#allocation2 + $0x84] sm:$0xff]
      %v681 = vld [vmem:[#allocation2 + $0x8c] sm:$0xf]
      %v682 = vld [vmem:[#allocation2 + $0x90] sm:$0xff]
      %v683 = vld [vmem:[#allocation2 + $0x98] sm:$0xf]
      %v684 = vld [vmem:[#allocation2 + $0x9c] sm:$0xff]
      %v685 = vld [vmem:[#allocation2 + $0xa4] sm:$0xf]
      %v686 = vld [vmem:[#allocation2 + $0xa8] sm:$0xff]
      %v687 = vld [vmem:[#allocation2 + $0xb0] sm:$0xf]
      %v688 = vld [vmem:[#allocation2 + $0xb4] sm:$0xff]
      %v689 = vld [vmem:[#allocation2 + $0xbc] sm:$0xf]
      %v690 = vld [vmem:[#allocation2 + $0xc0] sm:$0xff]
      %v691 = vld [vmem:[#allocation2 + $0xc8] sm:$0xf]
      %v692 = vld [vmem:[#allocation2 + $0xcc] sm:$0xff]
      %v693 = vld [vmem:[#allocation2 + $0xd4] sm:$0xf]
      %v694 = vld [vmem:[%s2] sm:$0xff]
      %v695 = vld [vmem:[%s2 + $0x8] sm:$0xff]
      %697 = vset.pattern.permute.xlu0 0
      %698 = vperm.xlu0 %697, %v694
      %v699 = vpop.permute.xlu0 %698
      %702 = vset.pattern.permute.xlu0 0
      %703 = vperm.xlu0 %702, %v695
      %v704 = vpop.permute.xlu0 %703
      %v708 = vunpack.c.l.b16 %v656
      %v709 = vunpack.c.h.b16 %v656
      %v710 = vunpack.c.l.b16 %v657
      %v711 = vunpack.c.h.b16 %v657
      %v712 = vpack.c.b16 %v710, %v708
      %v713 = vpack.c.b16 %v711, %v709
      %v751 = vunpack.c.l.b16 %v658
      %v752 = vunpack.c.h.b16 %v658
      %v753 = vunpack.c.l.b16 %v659
      %v754 = vunpack.c.l.b16 %v660
      %v755 = vunpack.c.h.b16 %v660
      %v756 = vunpack.c.l.b16 %v661
      %v757 = vunpack.c.l.b16 %v662
      %v758 = vunpack.c.h.b16 %v662
      %v759 = vunpack.c.l.b16 %v663
      %v760 = vunpack.c.l.b16 %v664
      %v761 = vunpack.c.h.b16 %v664
      %v762 = vunpack.c.l.b16 %v665
      %v763 = vunpack.c.l.b16 %v666
      %v764 = vunpack.c.h.b16 %v666
      %v765 = vunpack.c.l.b16 %v667
      %v766 = vunpack.c.l.b16 %v668
      %v767 = vunpack.c.h.b16 %v668
      %v768 = vunpack.c.l.b16 %v669
      %v769 = vunpack.c.l.b16 %v670
      %v770 = vunpack.c.h.b16 %v670
      %v771 = vunpack.c.l.b16 %v671
      %v772 = vunpack.c.l.b16 %v672
      %v773 = vunpack.c.h.b16 %v672
      %v774 = vunpack.c.l.b16 %v673
      %v775 = vunpack.c.l.b16 %v674
      %v776 = vunpack.c.h.b16 %v674
      %v777 = vunpack.c.l.b16 %v675
      %v778 = vunpack.c.l.b16 %v676
      %v779 = vunpack.c.h.b16 %v676
      %v780 = vunpack.c.l.b16 %v677
      %v781 = vunpack.c.l.b16 %v678
      %v782 = vunpack.c.h.b16 %v678
      %v783 = vunpack.c.l.b16 %v679
      %v784 = vunpack.c.l.b16 %v680
      %v785 = vunpack.c.h.b16 %v680
      %v786 = vunpack.c.l.b16 %v681
      %v787 = vunpack.c.l.b16 %v682
      %v788 = vunpack.c.h.b16 %v682
      %v789 = vunpack.c.l.b16 %v683
      %v790 = vunpack.c.l.b16 %v684
      %v791 = vunpack.c.h.b16 %v684
      %v792 = vunpack.c.l.b16 %v685
      %v793 = vunpack.c.l.b16 %v686
      %v794 = vunpack.c.h.b16 %v686
      %v795 = vunpack.c.l.b16 %v687
      %v796 = vunpack.c.l.b16 %v688
      %v797 = vunpack.c.h.b16 %v688
      %v798 = vunpack.c.l.b16 %v689
      %v799 = vunpack.c.l.b16 %v690
      %v800 = vunpack.c.h.b16 %v690
      %v801 = vunpack.c.l.b16 %v691
      %v802 = vunpack.c.l.b16 %v692
      %v803 = vunpack.c.h.b16 %v692
      %v804 = vunpack.c.l.b16 %v693
      %v805 = vpack.c.b16 %v754, %v751
      %v806 = vpack.c.b16 %v755, %v752
      %v807 = vpack.c.b16 %v756, %v753
      %v808 = vpack.c.b16 %v760, %v757
      %v809 = vpack.c.b16 %v761, %v758
      %v810 = vpack.c.b16 %v762, %v759
      %v811 = vpack.c.b16 %v766, %v763
      %v812 = vpack.c.b16 %v767, %v764
      %v813 = vpack.c.b16 %v768, %v765
      %v814 = vpack.c.b16 %v772, %v769
      %v815 = vpack.c.b16 %v773, %v770
      %v816 = vpack.c.b16 %v774, %v771
      %v817 = vpack.c.b16 %v778, %v775
      %v818 = vpack.c.b16 %v779, %v776
      %v819 = vpack.c.b16 %v780, %v777
      %v820 = vpack.c.b16 %v784, %v781
      %v821 = vpack.c.b16 %v785, %v782
      %v822 = vpack.c.b16 %v786, %v783
      %v823 = vpack.c.b16 %v790, %v787
      %v824 = vpack.c.b16 %v791, %v788
      %v825 = vpack.c.b16 %v792, %v789
      %v826 = vpack.c.b16 %v796, %v793
      %v827 = vpack.c.b16 %v797, %v794
      %v828 = vpack.c.b16 %v798, %v795
      %v829 = vpack.c.b16 %v802, %v799
      %v830 = vpack.c.b16 %v803, %v800
      %v831 = vpack.c.b16 %v804, %v801
      %vm859 = vcmask 130048
      %v861 = vsel %vm859, %v713, 0
      %863 = vmatprep.subr.bf16.mxu0 %v827
      %864 = vmatpush1.bf16.msra.mxu0 %v826
      %865 = vmatprep.subr.bf16.mxu0 %v824
      %866 = vmatpush1.bf16.msra.mxu0 %v823
      %867 = vmatprep.subr.bf16.mxu0 %v821
      %868 = vmatpush1.bf16.msra.mxu0 %v820
      %869 = vmatprep.subr.bf16.mxu0 %v818
      %870 = vmatpush1.bf16.msra.mxu0 %v817
      %871 = vmatprep.subr.bf16.mxu0 %v815
      %872 = vmatpush1.bf16.msra.mxu0 %v814
      %873 = vmatprep.subr.bf16.mxu0 %v812
      %874 = vmatpush1.bf16.msra.mxu0 %v811
      %875 = vmatprep.subr.bf16.mxu0 %v809
      %876 = vmatpush1.bf16.msra.mxu0 %v808
      %877 = vmatprep.subr.bf16.mxu0 %v806
      %878 = vmatpush1.bf16.msra.mxu0 %v805
      %879 = vmatprep.subr.bf16.mxu0 0
      %880 = vmatpush2.bf16.msra.mxu0 0
      %881 = vmatprep.subr.bf16.mxu0 0
      %882 = vmatpush2.bf16.msra.mxu0 0
      %883 = vmatprep.subr.bf16.mxu0 0
      %884 = vmatpush2.bf16.msra.mxu0 0
      %885 = vmatprep.subr.bf16.mxu0 0
      %886 = vmatpush2.bf16.msra.mxu0 0
      %887 = vmatprep.subr.bf16.mxu0 0
      %888 = vmatpush2.bf16.msra.mxu0 0
      %889 = vmatprep.subr.bf16.mxu0 0
      %890 = vmatpush2.bf16.msra.mxu0 0
      %891 = vmatprep.subr.bf16.mxu0 0
      %892 = vmatpush2.bf16.msra.mxu0 0
      %893 = vmatprep.subr.bf16.mxu0 %v830
      %894 = vmatpush2.bf16.msra.mxu0 %v829
      %895 = vmatprep.mubr.bf16.mxu0 %v861
      %896 = vmatmul.mubr.bf16.gmra.mxu0 %v712
      %v897 = vpop.f32.mrf.mxu0
      %v898 = vadd.f32 %v699, %v897
      %v899 = vpop.f32.mrf.mxu0
      %v900 = vadd.f32 %v699, %v899
      %v901 = vpop.f32.mrf.mxu0
      %v902 = vadd.f32 %v704, %v901
      %v903 = vpop.f32.mrf.mxu0
      %v904 = vadd.f32 %v704, %v903
      %905 = vdwg.mxu0
      %906 = vmatprep.subr.bf16.mxu0 0
      %907 = vmatpush1.bf16.msra.mxu0 %v828
      %908 = vmatprep.subr.bf16.mxu0 0
      %909 = vmatpush1.bf16.msra.mxu0 %v825
      %910 = vmatprep.subr.bf16.mxu0 0
      %911 = vmatpush1.bf16.msra.mxu0 %v822
      %912 = vmatprep.subr.bf16.mxu0 0
      %913 = vmatpush1.bf16.msra.mxu0 %v819
      %914 = vmatprep.subr.bf16.mxu0 0
      %915 = vmatpush1.bf16.msra.mxu0 %v816
      %916 = vmatprep.subr.bf16.mxu0 0
      %917 = vmatpush1.bf16.msra.mxu0 %v813
      %918 = vmatprep.subr.bf16.mxu0 0
      %919 = vmatpush1.bf16.msra.mxu0 %v810
      %920 = vmatprep.subr.bf16.mxu0 0
      %921 = vmatpush1.bf16.msra.mxu0 %v807
      %922 = vmatprep.subr.bf16.mxu0 0
      %923 = vmatpush2.bf16.msra.mxu0 0
      %924 = vmatprep.subr.bf16.mxu0 0
      %925 = vmatpush2.bf16.msra.mxu0 0
      %926 = vmatprep.subr.bf16.mxu0 0
      %927 = vmatpush2.bf16.msra.mxu0 0
      %928 = vmatprep.subr.bf16.mxu0 0
      %929 = vmatpush2.bf16.msra.mxu0 0
      %930 = vmatprep.subr.bf16.mxu0 0
      %931 = vmatpush2.bf16.msra.mxu0 0
      %932 = vmatprep.subr.bf16.mxu0 0
      %933 = vmatpush2.bf16.msra.mxu0 0
      %934 = vmatprep.subr.bf16.mxu0 0
      %935 = vmatpush2.bf16.msra.mxu0 0
      %936 = vmatprep.subr.bf16.mxu0 0
      %937 = vmatpush2.bf16.msra.mxu0 %v831
      %938 = vmatprep.mubr.bf16.mxu0 %v861
      %939 = vmatmul.mubr.bf16.gmra.mxu0 %v712
      %v940 = vpop.f32.mrf.mxu0
      %v941 = vadd.f32 %v699, %v940
      %v942 = vpop.f32.mrf.mxu0
      %v943 = vpop.f32.mrf.mxu0
      %v944 = vadd.f32 %v704, %v943
      %v945 = vpop.f32.mrf.mxu0
      %946 = vdwg.mxu0
      %v947 = vmax.f32 %v898, 0.0
      %v948 = vmax.f32 %v900, 0.0
      %v949 = vmax.f32 %v941, 0.0
      %v950 = vmax.f32 %v902, 0.0
      %v951 = vmax.f32 %v904, 0.0
      %v952 = vmax.f32 %v944, 0.0
      %959 = vrot.lane.b32.xlu0 %v947, 127
      %v960 = vpop.permute.xlu0 %959
      %961 = vrot.lane.b32.xlu0 %v948, 127
      %v962 = vpop.permute.xlu0 %961
      %963 = vrot.lane.b32.xlu0 %v949, 127
      %v964 = vpop.permute.xlu0 %963
      %965 = vrot.lane.b32.xlu0 %v950, 127
      %v966 = vpop.permute.xlu0 %965
      %967 = vrot.lane.b32.xlu0 %v951, 127
      %v968 = vpop.permute.xlu0 %967
      %969 = vrot.lane.b32.xlu0 %v952, 127
      %v970 = vpop.permute.xlu0 %969
      %vm971 = vcmask 1039360
      %v972 = vsel %vm971, %v960, %v962
      %v973 = vsel %vm971, %v962, %v964
      %v974 = vsel %vm971, %v966, %v968
      %v975 = vsel %vm971, %v968, %v970
      %v982 = vmax.f32 %v947, %v972
      %v983 = vmax.f32 %v948, %v973
      %v984 = vmax.f32 %v949, %v964
      %v985 = vmax.f32 %v950, %v974
      %v986 = vmax.f32 %v951, %v975
      %v987 = vmax.f32 %v952, %v970
      %994 = vrot.lane.b32.xlu0 %v982, 110
      %v995 = vpop.permute.xlu0 %994
      %996 = vrot.lane.b32.xlu0 %v983, 110
      %v997 = vpop.permute.xlu0 %996
      %998 = vrot.lane.b32.xlu0 %v984, 110
      %v999 = vpop.permute.xlu0 %998
      %1000 = vrot.lane.b32.xlu0 %v985, 110
      %v1001 = vpop.permute.xlu0 %1000
      %1002 = vrot.lane.b32.xlu0 %v986, 110
      %v1003 = vpop.permute.xlu0 %1002
      %1004 = vrot.lane.b32.xlu0 %v987, 110
      %v1005 = vpop.permute.xlu0 %1004
      %vm1006 = vcmask 900096
      %v1007 = vsel %vm1006, %v995, %v997
      %v1008 = vsel %vm1006, %v997, %v999
      %v1009 = vsel %vm1006, %v1001, %v1003
      %v1010 = vsel %vm1006, %v1003, %v1005
      %v1017 = vmax.f32 %v982, %v1007
      %v1018 = vmax.f32 %v983, %v1008
      %v1019 = vmax.f32 %v984, %v999
      %v1020 = vmax.f32 %v985, %v1009
      %v1021 = vmax.f32 %v986, %v1010
      %v1022 = vmax.f32 %v987, %v1005
      %v1023 = vpack.c.bf16 %v1020, %v1017
      %v1024 = vpack.c.bf16 %v1021, %v1018
      %v1025 = vpack.c.bf16 %v1022, %v1019
      %v1026 = vld [vmem:[%s3] sm:$0xf]
      %v1027 = vld [vmem:[%s3 + $0x4] sm:$0xf]
      %v1028 = vld [vmem:[%s3 + $0x8] sm:$0xf]
      %v1029 = vld [vmem:[%s3 + $0xc] sm:$0xf]
      %v1030 = vld [vmem:[%s3 + $0x10] sm:$0xf]
      %v1031 = vld [vmem:[%s3 + $0x14] sm:$0xf]
      %v1032 = vld [vmem:[%s3 + $0x18] sm:$0xf]
      %v1033 = vld [vmem:[%s3 + $0x1c] sm:$0xf]
      %v1034 = vld [vmem:[%s3 + $0x20] sm:$0xf]
      %v1035 = vld [vmem:[%s3 + $0x24] sm:$0xf]
      %v1036 = vld [vmem:[%s3 + $0x28] sm:$0xf]
      %v1037 = vld [vmem:[%s3 + $0x2c] sm:$0xf]
      %v1038 = vld [vmem:[%s3 + $0x30] sm:$0xf]
      %v1039 = vld [vmem:[%s3 + $0x34] sm:$0xf]
      %v1040 = vld [vmem:[%s3 + $0x38] sm:$0xf]
      %v1041 = vld [vmem:[%s3 + $0x3c] sm:$0xf]
      %v1042 = vld [vmem:[%s3 + $0x40] sm:$0xf]
      %v1043 = vld [vmem:[%s3 + $0x44] sm:$0xf]
      %v1044 = vld [vmem:[%s3 + $0x48] sm:$0xf]
      %v1045 = vld [vmem:[%s3 + $0x4c] sm:$0xf]
      %v1046 = vld [vmem:[%s3 + $0x50] sm:$0xf]
      %v1047 = vld [vmem:[%s3 + $0x54] sm:$0xf]
      %v1048 = vld [vmem:[%s3 + $0x58] sm:$0xf]
      %v1049 = vld [vmem:[%s3 + $0x5c] sm:$0xf]
      %v1050 = vld [vmem:[%s3 + $0x60] sm:$0xf]
      %v1051 = vld [vmem:[%s3 + $0x64] sm:$0xf]
      %v1052 = vld [vmem:[%s3 + $0x68] sm:$0xf]
      %v1053 = vld [vmem:[%s3 + $0x6c] sm:$0xf]
      %v1054 = vld [vmem:[%s3 + $0x70] sm:$0xf]
      %v1055 = vld [vmem:[%s3 + $0x74] sm:$0xf]
      %v1056 = vld [vmem:[%s3 + $0x78] sm:$0xf]
      %v1057 = vld [vmem:[%s3 + $0x7c] sm:$0xf]
      %v1058 = vld [vmem:[%s3 + $0x80] sm:$0xf]
      %v1059 = vld [vmem:[%s3 + $0x84] sm:$0x3]
      %v1094 = vunpack.c.l.b16 %v1026
      %v1095 = vunpack.c.l.b16 %v1027
      %v1096 = vunpack.c.l.b16 %v1028
      %v1097 = vunpack.c.l.b16 %v1029
      %v1098 = vunpack.c.l.b16 %v1030
      %v1099 = vunpack.c.l.b16 %v1031
      %v1100 = vunpack.c.l.b16 %v1032
      %v1101 = vunpack.c.l.b16 %v1033
      %v1102 = vunpack.c.l.b16 %v1034
      %v1103 = vunpack.c.l.b16 %v1035
      %v1104 = vunpack.c.l.b16 %v1036
      %v1105 = vunpack.c.l.b16 %v1037
      %v1106 = vunpack.c.l.b16 %v1038
      %v1107 = vunpack.c.l.b16 %v1039
      %v1108 = vunpack.c.l.b16 %v1040
      %v1109 = vunpack.c.l.b16 %v1041
      %v1110 = vunpack.c.l.b16 %v1042
      %v1111 = vunpack.c.l.b16 %v1043
      %v1112 = vunpack.c.l.b16 %v1044
      %v1113 = vunpack.c.l.b16 %v1045
      %v1114 = vunpack.c.l.b16 %v1046
      %v1115 = vunpack.c.l.b16 %v1047
      %v1116 = vunpack.c.l.b16 %v1048
      %v1117 = vunpack.c.l.b16 %v1049
      %v1118 = vunpack.c.l.b16 %v1050
      %v1119 = vunpack.c.l.b16 %v1051
      %v1120 = vunpack.c.l.b16 %v1052
      %v1121 = vunpack.c.l.b16 %v1053
      %v1122 = vunpack.c.l.b16 %v1054
      %v1123 = vunpack.c.l.b16 %v1055
      %v1124 = vunpack.c.l.b16 %v1056
      %v1125 = vunpack.c.l.b16 %v1057
      %v1126 = vunpack.c.l.b16 %v1058
      %v1127 = vunpack.c.l.b16 %v1059
      %v1128 = vpack.c.b16 %v1095, %v1094
      %v1129 = vpack.c.b16 %v1097, %v1096
      %v1130 = vpack.c.b16 %v1099, %v1098
      %v1131 = vpack.c.b16 %v1101, %v1100
      %v1132 = vpack.c.b16 %v1103, %v1102
      %v1133 = vpack.c.b16 %v1105, %v1104
      %v1134 = vpack.c.b16 %v1107, %v1106
      %v1135 = vpack.c.b16 %v1109, %v1108
      %v1136 = vpack.c.b16 %v1111, %v1110
      %v1137 = vpack.c.b16 %v1113, %v1112
      %v1138 = vpack.c.b16 %v1115, %v1114
      %v1139 = vpack.c.b16 %v1117, %v1116
      %v1140 = vpack.c.b16 %v1119, %v1118
      %v1141 = vpack.c.b16 %v1121, %v1120
      %v1142 = vpack.c.b16 %v1123, %v1122
      %v1143 = vpack.c.b16 %v1125, %v1124
      %v1144 = vpack.c.b16 %v1127, %v1126
      %vm1161 = vcmask 89088
      %v1163 = vsel %vm1161, %v1025, 0
      %vm1165 = vcmask 1044480
      %vm1166 = vcmask 1045504
      %v1167 = vsel %vm1165, 4294967295, 65535
      %v1168 = vsel %vm1166, %v1167, 0
      %v1170 = vand.u32 %v1144, %v1168
      %1172 = vmatprep.subr.bf16.mxu0 0
      %1173 = vmatpush1.bf16.msra.mxu0 %v1135
      %1174 = vmatprep.subr.bf16.mxu0 0
      %1175 = vmatpush1.bf16.msra.mxu0 %v1134
      %1176 = vmatprep.subr.bf16.mxu0 0
      %1177 = vmatpush1.bf16.msra.mxu0 %v1133
      %1178 = vmatprep.subr.bf16.mxu0 0
      %1179 = vmatpush1.bf16.msra.mxu0 %v1132
      %1180 = vmatprep.subr.bf16.mxu0 0
      %1181 = vmatpush1.bf16.msra.mxu0 %v1131
      %1182 = vmatprep.subr.bf16.mxu0 0
      %1183 = vmatpush1.bf16.msra.mxu0 %v1130
      %1184 = vmatprep.subr.bf16.mxu0 0
      %1185 = vmatpush1.bf16.msra.mxu0 %v1129
      %1186 = vmatprep.subr.bf16.mxu0 0
      %1187 = vmatpush1.bf16.msra.mxu0 %v1128
      %1188 = vmatprep.subr.bf16.mxu0 0
      %1189 = vmatpush2.bf16.msra.mxu0 %v1143
      %1190 = vmatprep.subr.bf16.mxu0 0
      %1191 = vmatpush2.bf16.msra.mxu0 %v1142
      %1192 = vmatprep.subr.bf16.mxu0 0
      %1193 = vmatpush2.bf16.msra.mxu0 %v1141
      %1194 = vmatprep.subr.bf16.mxu0 0
      %1195 = vmatpush2.bf16.msra.mxu0 %v1140
      %1196 = vmatprep.subr.bf16.mxu0 0
      %1197 = vmatpush2.bf16.msra.mxu0 %v1139
      %1198 = vmatprep.subr.bf16.mxu0 0
      %1199 = vmatpush2.bf16.msra.mxu0 %v1138
      %1200 = vmatprep.subr.bf16.mxu0 0
      %1201 = vmatpush2.bf16.msra.mxu0 %v1137
      %1202 = vmatprep.subr.bf16.mxu0 0
      %1203 = vmatpush2.bf16.msra.mxu0 %v1136
      %1204 = vmatprep.mubr.bf16.mxu0 %v1024
      %1205 = vmatmul.mubr.bf16.gmra.mxu0 %v1023
      %v1206 = vpop.f32.mrf.mxu0
      %v1207 = vadd.f32 0.0, %v1206
      %v1208 = vpop.f32.mrf.mxu0
      %v1209 = vpop.f32.mrf.mxu0
      %v1210 = vadd.f32 0.0, %v1209
      %v1211 = vpop.f32.mrf.mxu0
      %1212 = vdwg.mxu0
      %1213 = vmatprep.subr.bf16.mxu0 0
      %1214 = vmatpush1.bf16.msra.mxu0 0
      %1215 = vmatprep.subr.bf16.mxu0 0
      %1216 = vmatpush1.bf16.msra.mxu0 0
      %1217 = vmatprep.subr.bf16.mxu0 0
      %1218 = vmatpush1.bf16.msra.mxu0 0
      %1219 = vmatprep.subr.bf16.mxu0 0
      %1220 = vmatpush1.bf16.msra.mxu0 0
      %1221 = vmatprep.subr.bf16.mxu0 0
      %1222 = vmatpush1.bf16.msra.mxu0 0
      %1223 = vmatprep.subr.bf16.mxu0 0
      %1224 = vmatpush1.bf16.msra.mxu0 0
      %1225 = vmatprep.subr.bf16.mxu0 0
      %1226 = vmatpush1.bf16.msra.mxu0 0
      %1227 = vmatprep.subr.bf16.mxu0 0
      %1228 = vmatpush1.bf16.msra.mxu0 %v1170
      %1229 = vmatprep.subr.bf16.mxu0 0
      %1230 = vmatpush2.bf16.msra.mxu0 0
      %1231 = vmatprep.subr.bf16.mxu0 0
      %1232 = vmatpush2.bf16.msra.mxu0 0
      %1233 = vmatprep.subr.bf16.mxu0 0
      %1234 = vmatpush2.bf16.msra.mxu0 0
      %1235 = vmatprep.subr.bf16.mxu0 0
      %1236 = vmatpush2.bf16.msra.mxu0 0
      %1237 = vmatprep.subr.bf16.mxu0 0
      %1238 = vmatpush2.bf16.msra.mxu0 0
      %1239 = vmatprep.subr.bf16.mxu0 0
      %1240 = vmatpush2.bf16.msra.mxu0 0
      %1241 = vmatprep.subr.bf16.mxu0 0
      %1242 = vmatpush2.bf16.msra.mxu0 0
      %1243 = vmatprep.subr.bf16.mxu0 0
      %1244 = vmatpush2.bf16.msra.mxu0 0
      %1245 = vmatprep.mubr.bf16.mxu0 0
      %1246 = vmatmul.mubr.bf16.gmra.mxu0 %v1163
      %v1247 = vpop.f32.mrf.mxu0
      %v1248 = vadd.f32 %v1207, %v1247
      %v1249 = vpop.f32.mrf.mxu0
      %v1250 = vpop.f32.mrf.mxu0
      %v1251 = vadd.f32 %v1210, %v1250
      %v1252 = vpop.f32.mrf.mxu0
      %1253 = vdwg.mxu0
      %v1254 = vpack.c.bf16 %v1251, %v1248
      %v1256 = vunpack.c.l.b16 %v1254
      %v1257 = vunpack.c.h.b16 %v1254
      %v1258 = vpack.c.b16 %v1256, %v1256
      %v1259 = vpack.c.b16 %v1257, %v1257
      %vm1262 = vcmask 633856
      %1263 = vst.msk [vmem:[#allocation3] sm:$0xf] %vm1262, %v1258
      %1264 = vst.msk [vmem:[#allocation3 + $0x4] sm:$0xf] %vm1262, %v1259
      %1265 = vrot.lane.b32.xlu0 %v1258, 127
      %v1266 = vpop.permute.xlu0 %1265
      %1267 = vrot.lane.b32.xlu0 %v1259, 127
      %v1268 = vpop.permute.xlu0 %1267
      %1271 = vst.msk [vmem:[#allocation3 + $0x8] sm:$0xf] %vm1262, %v1266
      %1272 = vst.msk [vmem:[#allocation3 + $0xc] sm:$0xf] %vm1262, %v1268
      %1273 = vrot.lane.b32.xlu0 %v1258, 126
      %v1274 = vpop.permute.xlu0 %1273
      %1275 = vrot.lane.b32.xlu0 %v1259, 126
      %v1276 = vpop.permute.xlu0 %1275
      %1279 = vst.msk [vmem:[#allocation3 + $0x10] sm:$0xf] %vm1262, %v1274
      %1280 = vst.msk [vmem:[#allocation3 + $0x14] sm:$0xf] %vm1262, %v1276
      %1281 = vrot.lane.b32.xlu0 %v1258, 118
      %v1282 = vpop.permute.xlu0 %1281
      %1283 = vrot.lane.b32.xlu0 %v1259, 118
      %v1284 = vpop.permute.xlu0 %1283
      %1287 = vst.msk [vmem:[#allocation3 + $0x18] sm:$0xf] %vm1262, %v1282
      %1288 = vst.msk [vmem:[#allocation3 + $0x1c] sm:$0xf] %vm1262, %v1284
      %1289 = vrot.lane.b32.xlu0 %v1258, 117
      %v1290 = vpop.permute.xlu0 %1289
      %1291 = vrot.lane.b32.xlu0 %v1259, 117
      %v1292 = vpop.permute.xlu0 %1291
      %1295 = vst.msk [vmem:[#allocation3 + $0x20] sm:$0xf] %vm1262, %v1290
      %1296 = vst.msk [vmem:[#allocation3 + $0x24] sm:$0xf] %vm1262, %v1292
      %1297 = vrot.lane.b32.xlu0 %v1258, 116
      %v1298 = vpop.permute.xlu0 %1297
      %1299 = vrot.lane.b32.xlu0 %v1259, 116
      %v1300 = vpop.permute.xlu0 %1299
      %1303 = vst.msk [vmem:[#allocation3 + $0x28] sm:$0xf] %vm1262, %v1298
      %1304 = vst.msk [vmem:[#allocation3 + $0x2c] sm:$0xf] %vm1262, %v1300
      %1305 = vrot.lane.b32.xlu0 %v1258, 108
      %v1306 = vpop.permute.xlu0 %1305
      %1307 = vrot.lane.b32.xlu0 %v1259, 108
      %v1308 = vpop.permute.xlu0 %1307
      %1311 = vst.msk [vmem:[#allocation3 + $0x30] sm:$0xf] %vm1262, %v1306
      %1312 = vst.msk [vmem:[#allocation3 + $0x34] sm:$0xf] %vm1262, %v1308
      %1313 = vrot.lane.b32.xlu0 %v1258, 107
      %v1314 = vpop.permute.xlu0 %1313
      %1315 = vrot.lane.b32.xlu0 %v1259, 107
      %v1316 = vpop.permute.xlu0 %1315
      %1319 = vst.msk [vmem:[#allocation3 + $0x38] sm:$0xf] %vm1262, %v1314
      %1320 = vst.msk [vmem:[#allocation3 + $0x3c] sm:$0xf] %vm1262, %v1316
      %1321 = vrot.lane.b32.xlu0 %v1258, 106
      %v1322 = vpop.permute.xlu0 %1321
      %1323 = vrot.lane.b32.xlu0 %v1259, 106
      %v1324 = vpop.permute.xlu0 %1323
      %1327 = vst.msk [vmem:[#allocation3 + $0x40] sm:$0xf] %vm1262, %v1322
      %1328 = vst.msk [vmem:[#allocation3 + $0x44] sm:$0xf] %vm1262, %v1324
      %v1329 = vld [vmem:[%s4] sm:$0xff]
      %v1330 = vld [vmem:[%s4 + $0x8] sm:$0xff]
      %v1331 = vld [vmem:[%s4 + $0x10] sm:$0xff]
      %v1332 = vld [vmem:[%s4 + $0x18] sm:$0xff]
      %v1333 = vld [vmem:[#allocation3] sm:$0xf]
      %v1334 = vld [vmem:[#allocation3 + $0x4] sm:$0xf]
      %v1335 = vld [vmem:[#allocation3 + $0x8] sm:$0xf]
      %v1336 = vld [vmem:[#allocation3 + $0xc] sm:$0xf]
      %v1337 = vld [vmem:[#allocation3 + $0x10] sm:$0xf]
      %v1338 = vld [vmem:[#allocation3 + $0x14] sm:$0xf]
      %v1339 = vld [vmem:[#allocation3 + $0x18] sm:$0xf]
      %v1340 = vld [vmem:[#allocation3 + $0x1c] sm:$0xf]
      %v1341 = vld [vmem:[#allocation3 + $0x20] sm:$0xf]
      %v1342 = vld [vmem:[#allocation3 + $0x24] sm:$0xf]
      %v1343 = vld [vmem:[#allocation3 + $0x28] sm:$0xf]
      %v1344 = vld [vmem:[#allocation3 + $0x2c] sm:$0xf]
      %v1345 = vld [vmem:[#allocation3 + $0x30] sm:$0xf]
      %v1346 = vld [vmem:[#allocation3 + $0x34] sm:$0xf]
      %v1347 = vld [vmem:[#allocation3 + $0x38] sm:$0xf]
      %v1348 = vld [vmem:[#allocation3 + $0x3c] sm:$0xf]
      %v1349 = vld [vmem:[#allocation3 + $0x40] sm:$0xf]
      %v1350 = vld [vmem:[#allocation3 + $0x44] sm:$0xf]
      %v1351 = vld [vmem:[%s5] sm:$0xff]
      %v1352 = vld [vmem:[%s5 + $0x8] sm:$0xff]
      %v1353 = vld [vmem:[%s5 + $0x10] sm:$0xff]
      %v1354 = vld [vmem:[%s5 + $0x18] sm:$0xff]
      %1356 = vset.pattern.permute.xlu0 0
      %1357 = vperm.xlu0 %1356, %v1351
      %v1358 = vpop.permute.xlu0 %1357
      %1361 = vset.pattern.permute.xlu0 0
      %1362 = vperm.xlu0 %1361, %v1352
      %v1363 = vpop.permute.xlu0 %1362
      %1366 = vset.pattern.permute.xlu0 0
      %1367 = vperm.xlu0 %1366, %v1353
      %v1368 = vpop.permute.xlu0 %1367
      %1371 = vset.pattern.permute.xlu0 0
      %1372 = vperm.xlu0 %1371, %v1354
      %v1373 = vpop.permute.xlu0 %1372
      %v1379 = vunpack.c.l.b16 %v1329
      %v1380 = vunpack.c.h.b16 %v1329
      %v1381 = vunpack.c.l.b16 %v1330
      %v1382 = vunpack.c.h.b16 %v1330
      %v1383 = vunpack.c.l.b16 %v1331
      %v1384 = vunpack.c.h.b16 %v1331
      %v1385 = vunpack.c.l.b16 %v1332
      %v1386 = vunpack.c.h.b16 %v1332
      %v1387 = vpack.c.b16 %v1381, %v1379
      %v1388 = vpack.c.b16 %v1382, %v1380
      %v1389 = vpack.c.b16 %v1385, %v1383
      %v1390 = vpack.c.b16 %v1386, %v1384
      %v1411 = vunpack.c.l.b16 %v1333
      %v1412 = vunpack.c.l.b16 %v1334
      %v1413 = vunpack.c.l.b16 %v1335
      %v1414 = vunpack.c.l.b16 %v1336
      %v1415 = vunpack.c.l.b16 %v1337
      %v1416 = vunpack.c.l.b16 %v1338
      %v1417 = vunpack.c.l.b16 %v1339
      %v1418 = vunpack.c.l.b16 %v1340
      %v1419 = vunpack.c.l.b16 %v1341
      %v1420 = vunpack.c.l.b16 %v1342
      %v1421 = vunpack.c.l.b16 %v1343
      %v1422 = vunpack.c.l.b16 %v1344
      %v1423 = vunpack.c.l.b16 %v1345
      %v1424 = vunpack.c.l.b16 %v1346
      %v1425 = vunpack.c.l.b16 %v1347
      %v1426 = vunpack.c.l.b16 %v1348
      %v1427 = vunpack.c.l.b16 %v1349
      %v1428 = vunpack.c.l.b16 %v1350
      %v1429 = vpack.c.b16 %v1412, %v1411
      %v1430 = vpack.c.b16 %v1414, %v1413
      %v1431 = vpack.c.b16 %v1416, %v1415
      %v1432 = vpack.c.b16 %v1418, %v1417
      %v1433 = vpack.c.b16 %v1420, %v1419
      %v1434 = vpack.c.b16 %v1422, %v1421
      %v1435 = vpack.c.b16 %v1424, %v1423
      %v1436 = vpack.c.b16 %v1426, %v1425
      %v1437 = vpack.c.b16 %v1428, %v1427
      %v1448 = vsel %vm859, %v1388, 0
      %v1451 = vsel %vm859, %v1390, 0
      %1453 = vmatprep.subr.bf16.mxu0 0
      %1454 = vmatpush1.bf16.msra.mxu0 %v1436
      %1455 = vmatprep.subr.bf16.mxu0 0
      %1456 = vmatpush1.bf16.msra.mxu0 %v1435
      %1457 = vmatprep.subr.bf16.mxu0 0
      %1458 = vmatpush1.bf16.msra.mxu0 %v1434
      %1459 = vmatprep.subr.bf16.mxu0 0
      %1460 = vmatpush1.bf16.msra.mxu0 %v1433
      %1461 = vmatprep.subr.bf16.mxu0 0
      %1462 = vmatpush1.bf16.msra.mxu0 %v1432
      %1463 = vmatprep.subr.bf16.mxu0 0
      %1464 = vmatpush1.bf16.msra.mxu0 %v1431
      %1465 = vmatprep.subr.bf16.mxu0 0
      %1466 = vmatpush1.bf16.msra.mxu0 %v1430
      %1467 = vmatprep.subr.bf16.mxu0 0
      %1468 = vmatpush1.bf16.msra.mxu0 %v1429
      %1469 = vmatprep.subr.bf16.mxu0 0
      %1470 = vmatpush2.bf16.msra.mxu0 0
      %1471 = vmatprep.subr.bf16.mxu0 0
      %1472 = vmatpush2.bf16.msra.mxu0 0
      %1473 = vmatprep.subr.bf16.mxu0 0
      %1474 = vmatpush2.bf16.msra.mxu0 0
      %1475 = vmatprep.subr.bf16.mxu0 0
      %1476 = vmatpush2.bf16.msra.mxu0 0
      %1477 = vmatprep.subr.bf16.mxu0 0
      %1478 = vmatpush2.bf16.msra.mxu0 0
      %1479 = vmatprep.subr.bf16.mxu0 0
      %1480 = vmatpush2.bf16.msra.mxu0 0
      %1481 = vmatprep.subr.bf16.mxu0 0
      %1482 = vmatpush2.bf16.msra.mxu0 0
      %1483 = vmatprep.subr.bf16.mxu0 0
      %1484 = vmatpush2.bf16.msra.mxu0 %v1437
      %1485 = vmatprep.mubr.bf16.mxu0 %v1448
      %1486 = vmatmul.mubr.bf16.gmra.mxu0 %v1387
      %v1487 = vpop.f32.mrf.mxu0
      %v1488 = vadd.f32 %v1358, %v1487
      %v1489 = vpop.f32.mrf.mxu0
      %v1490 = vpop.f32.mrf.mxu0
      %v1491 = vadd.f32 %v1363, %v1490
      %v1492 = vpop.f32.mrf.mxu0
      %1493 = vmatprep.mubr.bf16.mxu0 %v1451
      %1494 = vmatmul.mubr.bf16.gmra.mxu0 %v1389
      %v1495 = vpop.f32.mrf.mxu0
      %v1496 = vadd.f32 %v1368, %v1495
      %v1497 = vpop.f32.mrf.mxu0
      %v1498 = vpop.f32.mrf.mxu0
      %v1499 = vadd.f32 %v1373, %v1498
      %v1500 = vpop.f32.mrf.mxu0
      %1501 = vdwg.mxu0
      %v1502 = vmax.f32 %v1488, 0.0
      %v1503 = vmax.f32 %v1491, 0.0
      %v1504 = vmax.f32 %v1496, 0.0
      %v1505 = vmax.f32 %v1499, 0.0
      %1510 = vrot.lane.b32.xlu0 %v1502, 127
      %v1511 = vpop.permute.xlu0 %1510
      %1512 = vrot.lane.b32.xlu0 %v1503, 127
      %v1513 = vpop.permute.xlu0 %1512
      %1514 = vrot.lane.b32.xlu0 %v1504, 127
      %v1515 = vpop.permute.xlu0 %1514
      %1516 = vrot.lane.b32.xlu0 %v1505, 127
      %v1517 = vpop.permute.xlu0 %1516
      %v1522 = vmax.f32 %v1502, %v1511
      %v1523 = vmax.f32 %v1503, %v1513
      %v1524 = vmax.f32 %v1504, %v1515
      %v1525 = vmax.f32 %v1505, %v1517
      %1530 = vrot.lane.b32.xlu0 %v1522, 118
      %v1531 = vpop.permute.xlu0 %1530
      %1532 = vrot.lane.b32.xlu0 %v1523, 118
      %v1533 = vpop.permute.xlu0 %1532
      %1534 = vrot.lane.b32.xlu0 %v1524, 118
      %v1535 = vpop.permute.xlu0 %1534
      %1536 = vrot.lane.b32.xlu0 %v1525, 118
      %v1537 = vpop.permute.xlu0 %1536
      %v1542 = vmax.f32 %v1522, %v1531
      %v1543 = vmax.f32 %v1523, %v1533
      %v1544 = vmax.f32 %v1524, %v1535
      %v1545 = vmax.f32 %v1525, %v1537
      %v1546 = vpack.c.bf16 %v1543, %v1542
      %v1547 = vpack.c.bf16 %v1545, %v1544
      %v1548 = vld [vmem:[%s6] sm:$0xf]
      %v1549 = vld [vmem:[%s6 + $0x4] sm:$0xf]
      %v1550 = vld [vmem:[%s6 + $0x8] sm:$0xf]
      %v1551 = vld [vmem:[%s6 + $0xc] sm:$0xf]
      %v1552 = vld [vmem:[%s6 + $0x10] sm:$0xf]
      %v1553 = vld [vmem:[%s6 + $0x14] sm:$0xf]
      %v1554 = vld [vmem:[%s6 + $0x18] sm:$0xf]
      %v1555 = vld [vmem:[%s6 + $0x1c] sm:$0xf]
      %v1556 = vld [vmem:[%s6 + $0x20] sm:$0x3]
      %v1566 = vunpack.c.l.b16 %v1548
      %v1567 = vunpack.c.l.b16 %v1549
      %v1568 = vunpack.c.l.b16 %v1550
      %v1569 = vunpack.c.l.b16 %v1551
      %v1570 = vunpack.c.l.b16 %v1552
      %v1571 = vunpack.c.l.b16 %v1553
      %v1572 = vunpack.c.l.b16 %v1554
      %v1573 = vunpack.c.l.b16 %v1555
      %v1574 = vunpack.c.l.b16 %v1556
      %v1575 = vpack.c.b16 %v1567, %v1566
      %v1576 = vpack.c.b16 %v1569, %v1568
      %v1577 = vpack.c.b16 %v1571, %v1570
      %v1578 = vpack.c.b16 %v1573, %v1572
      %v1579 = vpack.c.b16 %v1574, %v1574
      %vm1584 = vcmask 547840
      %v1586 = vsel %vm1584, %v1546, 0
      %v1589 = vsel %vm1584, %v1547, 0
      %vm1591 = vcmask 1040384
      %vm1592 = vcmask 1041408
      %v1593 = vsel %vm1591, 4294967295, 65535
      %v1594 = vsel %vm1592, %v1593, 0
      %v1596 = vand.u32 %v1579, %v1594
      %1598 = vmatprep.subr.bf16.mxu0 0
      %1599 = vmatpush1.bf16.msra.mxu0 0
      %1600 = vmatprep.subr.bf16.mxu0 0
      %1601 = vmatpush1.bf16.msra.mxu0 0
      %1602 = vmatprep.subr.bf16.mxu0 0
      %1603 = vmatpush1.bf16.msra.mxu0 0
      %1604 = vmatprep.subr.bf16.mxu0 0
      %1605 = vmatpush1.bf16.msra.mxu0 %v1596
      %1606 = vmatprep.subr.bf16.mxu0 0
      %1607 = vmatpush1.bf16.msra.mxu0 %v1578
      %1608 = vmatprep.subr.bf16.mxu0 0
      %1609 = vmatpush1.bf16.msra.mxu0 %v1577
      %1610 = vmatprep.subr.bf16.mxu0 0
      %1611 = vmatpush1.bf16.msra.mxu0 %v1576
      %1612 = vmatprep.subr.bf16.mxu0 0
      %1613 = vmatpush1.bf16.msra.mxu0 %v1575
      %1614 = vmatprep.subr.bf16.mxu0 0
      %1615 = vmatpush2.bf16.msra.mxu0 0
      %1616 = vmatprep.subr.bf16.mxu0 0
      %1617 = vmatpush2.bf16.msra.mxu0 0
      %1618 = vmatprep.subr.bf16.mxu0 0
      %1619 = vmatpush2.bf16.msra.mxu0 0
      %1620 = vmatprep.subr.bf16.mxu0 0
      %1621 = vmatpush2.bf16.msra.mxu0 0
      %1622 = vmatprep.subr.bf16.mxu0 0
      %1623 = vmatpush2.bf16.msra.mxu0 0
      %1624 = vmatprep.subr.bf16.mxu0 0
      %1625 = vmatpush2.bf16.msra.mxu0 0
      %1626 = vmatprep.subr.bf16.mxu0 0
      %1627 = vmatpush2.bf16.msra.mxu0 0
      %1628 = vmatprep.subr.bf16.mxu0 0
      %1629 = vmatpush2.bf16.msra.mxu0 0
      %1630 = vmatprep.mubr.bf16.mxu0 0
      %1631 = vmatmul.mubr.bf16.gmra.mxu0 %v1586
      %v1632 = vpop.f32.mrf.mxu0
      %v1633 = vadd.f32 0.0, %v1632
      %v1634 = vpop.f32.mrf.mxu0
      %v1635 = vpop.f32.mrf.mxu0
      %v1636 = vadd.f32 0.0, %v1635
      %v1637 = vpop.f32.mrf.mxu0
      %1638 = vmatprep.mubr.bf16.mxu0 0
      %1639 = vmatmul.mubr.bf16.gmra.mxu0 %v1589
      %v1640 = vpop.f32.mrf.mxu0
      %v1641 = vadd.f32 0.0, %v1640
      %v1642 = vpop.f32.mrf.mxu0
      %v1643 = vpop.f32.mrf.mxu0
      %v1644 = vadd.f32 0.0, %v1643
      %v1645 = vpop.f32.mrf.mxu0
      %1646 = vdwg.mxu0
      %v1647 = vpack.c.bf16 %v1636, %v1633
      %v1648 = vpack.c.bf16 %v1644, %v1641
      %v1649 = vld [vmem:[%s7] sm:$0xf]
      %v1650 = vld [vmem:[%s7 + $0x4] sm:$0xf]
      %v1651 = vld [vmem:[%s7 + $0x8] sm:$0xf]
      %v1652 = vld [vmem:[%s7 + $0xc] sm:$0xf]
      %v1653 = vld [vmem:[%s7 + $0x10] sm:$0xf]
      %v1654 = vld [vmem:[%s7 + $0x14] sm:$0xf]
      %v1655 = vld [vmem:[%s7 + $0x18] sm:$0xf]
      %v1656 = vld [vmem:[%s7 + $0x1c] sm:$0xf]
      %v1665 = vunpack.c.l.b16 %v1649
      %v1666 = vunpack.c.l.b16 %v1650
      %v1667 = vunpack.c.l.b16 %v1651
      %v1668 = vunpack.c.l.b16 %v1652
      %v1669 = vunpack.c.l.b16 %v1653
      %v1670 = vunpack.c.l.b16 %v1654
      %v1671 = vunpack.c.l.b16 %v1655
      %v1672 = vunpack.c.l.b16 %v1656
      %v1673 = vpack.c.b16 %v1666, %v1665
      %v1674 = vpack.c.b16 %v1668, %v1667
      %v1675 = vpack.c.b16 %v1670, %v1669
      %v1676 = vpack.c.b16 %v1672, %v1671
      %vm1677 = vcmask 261120
      %v1679 = vsel %vm1677, %v1673, 0
      %v1682 = vsel %vm1677, %v1674, 0
      %v1685 = vsel %vm1677, %v1675, 0
      %v1688 = vsel %vm1677, %v1676, 0
      %1690 = vmatprep.subr.bf16.mxu0 0
      %1691 = vmatpush1.bf16.msra.mxu0 0
      %1692 = vmatprep.subr.bf16.mxu0 0
      %1693 = vmatpush1.bf16.msra.mxu0 0
      %1694 = vmatprep.subr.bf16.mxu0 0
      %1695 = vmatpush1.bf16.msra.mxu0 0
      %1696 = vmatprep.subr.bf16.mxu0 0
      %1697 = vmatpush1.bf16.msra.mxu0 0
      %1698 = vmatprep.subr.bf16.mxu0 0
      %1699 = vmatpush1.bf16.msra.mxu0 0
      %1700 = vmatprep.subr.bf16.mxu0 0
      %1701 = vmatpush1.bf16.msra.mxu0 0
      %1702 = vmatprep.subr.bf16.mxu0 0
      %1703 = vmatpush1.bf16.msra.mxu0 %v1648
      %1704 = vmatprep.subr.bf16.mxu0 0
      %1705 = vmatpush1.bf16.msra.mxu0 %v1647
      %1706 = vmatprep.subr.bf16.mxu0 0
      %1707 = vmatpush2.bf16.msra.mxu0 0
      %1708 = vmatprep.subr.bf16.mxu0 0
      %1709 = vmatpush2.bf16.msra.mxu0 0
      %1710 = vmatprep.subr.bf16.mxu0 0
      %1711 = vmatpush2.bf16.msra.mxu0 0
      %1712 = vmatprep.subr.bf16.mxu0 0
      %1713 = vmatpush2.bf16.msra.mxu0 0
      %1714 = vmatprep.subr.bf16.mxu0 0
      %1715 = vmatpush2.bf16.msra.mxu0 0
      %1716 = vmatprep.subr.bf16.mxu0 0
      %1717 = vmatpush2.bf16.msra.mxu0 0
      %1718 = vmatprep.subr.bf16.mxu0 0
      %1719 = vmatpush2.bf16.msra.mxu0 0
      %1720 = vmatprep.subr.bf16.mxu0 0
      %1721 = vmatpush2.bf16.msra.mxu0 0
      %1722 = vmatprep.mubr.bf16.mxu0 0
      %1723 = vmatmul.mubr.bf16.gmra.mxu0 %v1679
      %v1724 = vpop.f32.mrf.mxu0
      %v1725 = vadd.f32 0.0, %v1724
      %v1726 = vpop.f32.mrf.mxu0
      %v1727 = vpop.f32.mrf.mxu0
      %v1728 = vadd.f32 0.0, %v1727
      %v1729 = vpop.f32.mrf.mxu0
      %1730 = vmatprep.mubr.bf16.mxu0 0
      %1731 = vmatmul.mubr.bf16.gmra.mxu0 %v1682
      %v1732 = vpop.f32.mrf.mxu0
      %v1733 = vadd.f32 0.0, %v1732
      %v1734 = vpop.f32.mrf.mxu0
      %v1735 = vpop.f32.mrf.mxu0
      %v1736 = vadd.f32 0.0, %v1735
      %v1737 = vpop.f32.mrf.mxu0
      %1738 = vmatprep.mubr.bf16.mxu0 0
      %1739 = vmatmul.mubr.bf16.gmra.mxu0 %v1685
      %v1740 = vpop.f32.mrf.mxu0
      %v1741 = vadd.f32 0.0, %v1740
      %v1742 = vpop.f32.mrf.mxu0
      %v1743 = vpop.f32.mrf.mxu0
      %v1744 = vadd.f32 0.0, %v1743
      %v1745 = vpop.f32.mrf.mxu0
      %1746 = vmatprep.mubr.bf16.mxu0 0
      %1747 = vmatmul.mubr.bf16.gmra.mxu0 %v1688
      %v1748 = vpop.f32.mrf.mxu0
      %v1749 = vadd.f32 0.0, %v1748
      %v1750 = vpop.f32.mrf.mxu0
      %v1751 = vpop.f32.mrf.mxu0
      %v1752 = vadd.f32 0.0, %v1751
      %v1753 = vpop.f32.mrf.mxu0
      %1754 = vdwg.mxu0
      %1757 = vrot.lane.b32.xlu0 %v1733, 16
      %v1758 = vpop.permute.xlu0 %1757
      %1759 = vrot.lane.b32.xlu0 %v1736, 16
      %v1760 = vpop.permute.xlu0 %1759
      %1765 = vrot.lane.b32.xlu0 %v1741, 32
      %v1766 = vpop.permute.xlu0 %1765
      %1767 = vrot.lane.b32.xlu0 %v1744, 32
      %v1768 = vpop.permute.xlu0 %1767
      %1773 = vrot.lane.b32.xlu0 %v1749, 48
      %v1774 = vpop.permute.xlu0 %1773
      %1775 = vrot.lane.b32.xlu0 %v1752, 48
      %v1776 = vpop.permute.xlu0 %1775
      %v1779 = vsel %vm859, %v1725, %v1758
      %v1780 = vsel %vm859, %v1728, %v1760
      %v1781 = vsel %vm1677, %v1779, %v1766
      %v1782 = vsel %vm1677, %v1780, %v1768
      %vm1783 = vcmask 392192
      %v1784 = vsel %vm1783, %v1781, %v1774
      %v1785 = vsel %vm1783, %v1782, %v1776
      %v1786 = vpack.c.bf16 %v1785, %v1784
      %v1787 = vld [vmem:[%s9] sm:$0xf]
      %v1788 = vld [vmem:[%s9 + $0x4] sm:$0xf]
      %v1789 = vld [vmem:[%s9 + $0x8] sm:$0xf]
      %v1790 = vld [vmem:[%s9 + $0xc] sm:$0xf]
      %v1791 = vld [vmem:[%s9 + $0x10] sm:$0xf]
      %v1792 = vld [vmem:[%s9 + $0x14] sm:$0xf]
      %v1793 = vld [vmem:[%s9 + $0x18] sm:$0xf]
      %v1794 = vld [vmem:[%s9 + $0x1c] sm:$0xf]
      %v1795 = vld [vmem:[%s8] sm:$0xff]
      %v1796 = vld [vmem:[%s8 + $0x8] sm:$0xff]
      %1798 = vset.pattern.permute.xlu0 0
      %1799 = vperm.xlu0 %1798, %v1795
      %v1800 = vpop.permute.xlu0 %1799
      %1803 = vset.pattern.permute.xlu0 0
      %1804 = vperm.xlu0 %1803, %v1796
      %v1805 = vpop.permute.xlu0 %1804
      %v1815 = vunpack.c.l.b16 %v1787
      %v1816 = vunpack.c.l.b16 %v1788
      %v1817 = vunpack.c.l.b16 %v1789
      %v1818 = vunpack.c.l.b16 %v1790
      %v1819 = vunpack.c.l.b16 %v1791
      %v1820 = vunpack.c.l.b16 %v1792
      %v1821 = vunpack.c.l.b16 %v1793
      %v1822 = vunpack.c.l.b16 %v1794
      %v1823 = vpack.c.b16 %v1816, %v1815
      %v1824 = vpack.c.b16 %v1818, %v1817
      %v1825 = vpack.c.b16 %v1820, %v1819
      %v1826 = vpack.c.b16 %v1822, %v1821
      %vm1831 = vcmask 523264
      %v1833 = vsel %vm1831, %v1786, 0
      %1835 = vmatprep.subr.bf16.mxu0 0
      %1836 = vmatpush1.bf16.msra.mxu0 0
      %1837 = vmatprep.subr.bf16.mxu0 0
      %1838 = vmatpush1.bf16.msra.mxu0 0
      %1839 = vmatprep.subr.bf16.mxu0 0
      %1840 = vmatpush1.bf16.msra.mxu0 0
      %1841 = vmatprep.subr.bf16.mxu0 0
      %1842 = vmatpush1.bf16.msra.mxu0 0
      %1843 = vmatprep.subr.bf16.mxu0 0
      %1844 = vmatpush1.bf16.msra.mxu0 %v1826
      %1845 = vmatprep.subr.bf16.mxu0 0
      %1846 = vmatpush1.bf16.msra.mxu0 %v1825
      %1847 = vmatprep.subr.bf16.mxu0 0
      %1848 = vmatpush1.bf16.msra.mxu0 %v1824
      %1849 = vmatprep.subr.bf16.mxu0 0
      %1850 = vmatpush1.bf16.msra.mxu0 %v1823
      %1851 = vmatprep.subr.bf16.mxu0 0
      %1852 = vmatpush2.bf16.msra.mxu0 0
      %1853 = vmatprep.subr.bf16.mxu0 0
      %1854 = vmatpush2.bf16.msra.mxu0 0
      %1855 = vmatprep.subr.bf16.mxu0 0
      %1856 = vmatpush2.bf16.msra.mxu0 0
      %1857 = vmatprep.subr.bf16.mxu0 0
      %1858 = vmatpush2.bf16.msra.mxu0 0
      %1859 = vmatprep.subr.bf16.mxu0 0
      %1860 = vmatpush2.bf16.msra.mxu0 0
      %1861 = vmatprep.subr.bf16.mxu0 0
      %1862 = vmatpush2.bf16.msra.mxu0 0
      %1863 = vmatprep.subr.bf16.mxu0 0
      %1864 = vmatpush2.bf16.msra.mxu0 0
      %1865 = vmatprep.subr.bf16.mxu0 0
      %1866 = vmatpush2.bf16.msra.mxu0 0
      %1867 = vmatprep.mubr.bf16.mxu0 0
      %1868 = vmatmul.mubr.bf16.gmra.mxu0 %v1833
      %v1869 = vpop.f32.mrf.mxu0
      %v1870 = vadd.f32 %v1800, %v1869
      %v1871 = vpop.f32.mrf.mxu0
      %v1872 = vpop.f32.mrf.mxu0
      %v1873 = vadd.f32 %v1805, %v1872
      %v1874 = vpop.f32.mrf.mxu0
      %1875 = vdwg.mxu0
      %v1876 = vmax.f32 %v1870, 0.0
      %v1877 = vmax.f32 %v1873, 0.0
      %v1878 = vpack.c.bf16 %v1877, %v1876
      %v1879 = vld [vmem:[%s10] sm:$0xf]
      %v1880 = vld [vmem:[%s10 + $0x4] sm:$0xf]
      %v1881 = vld [vmem:[%s10 + $0x8] sm:$0xf]
      %v1882 = vld [vmem:[%s10 + $0xc] sm:$0xf]
      %v1887 = vunpack.c.l.b16 %v1879
      %v1888 = vunpack.c.l.b16 %v1880
      %v1889 = vunpack.c.l.b16 %v1881
      %v1890 = vunpack.c.l.b16 %v1882
      %v1891 = vpack.c.b16 %v1888, %v1887
      %v1892 = vpack.c.b16 %v1890, %v1889
      %v1894 = vsel %vm859, %v1891, 0
      %v1897 = vsel %vm859, %v1892, 0
      %1899 = vmatprep.subr.bf16.mxu0 0
      %1900 = vmatpush1.bf16.msra.mxu0 0
      %1901 = vmatprep.subr.bf16.mxu0 0
      %1902 = vmatpush1.bf16.msra.mxu0 0
      %1903 = vmatprep.subr.bf16.mxu0 0
      %1904 = vmatpush1.bf16.msra.mxu0 0
      %1905 = vmatprep.subr.bf16.mxu0 0
      %1906 = vmatpush1.bf16.msra.mxu0 0
      %1907 = vmatprep.subr.bf16.mxu0 0
      %1908 = vmatpush1.bf16.msra.mxu0 0
      %1909 = vmatprep.subr.bf16.mxu0 0
      %1910 = vmatpush1.bf16.msra.mxu0 0
      %1911 = vmatprep.subr.bf16.mxu0 0
      %1912 = vmatpush1.bf16.msra.mxu0 0
      %1913 = vmatprep.subr.bf16.mxu0 0
      %1914 = vmatpush1.bf16.msra.mxu0 %v1878
      %1915 = vmatprep.subr.bf16.mxu0 0
      %1916 = vmatpush2.bf16.msra.mxu0 0
      %1917 = vmatprep.subr.bf16.mxu0 0
      %1918 = vmatpush2.bf16.msra.mxu0 0
      %1919 = vmatprep.subr.bf16.mxu0 0
      %1920 = vmatpush2.bf16.msra.mxu0 0
      %1921 = vmatprep.subr.bf16.mxu0 0
      %1922 = vmatpush2.bf16.msra.mxu0 0
      %1923 = vmatprep.subr.bf16.mxu0 0
      %1924 = vmatpush2.bf16.msra.mxu0 0
      %1925 = vmatprep.subr.bf16.mxu0 0
      %1926 = vmatpush2.bf16.msra.mxu0 0
      %1927 = vmatprep.subr.bf16.mxu0 0
      %1928 = vmatpush2.bf16.msra.mxu0 0
      %1929 = vmatprep.subr.bf16.mxu0 0
      %1930 = vmatpush2.bf16.msra.mxu0 0
      %1931 = vmatprep.mubr.bf16.mxu0 0
      %1932 = vmatmul.mubr.bf16.gmra.mxu0 %v1894
      %v1933 = vpop.f32.mrf.mxu0
      %v1934 = vadd.f32 0.0, %v1933
      %v1935 = vpop.f32.mrf.mxu0
      %v1936 = vpop.f32.mrf.mxu0
      %v1937 = vadd.f32 0.0, %v1936
      %v1938 = vpop.f32.mrf.mxu0
      %1939 = vmatprep.mubr.bf16.mxu0 0
      %1940 = vmatmul.mubr.bf16.gmra.mxu0 %v1897
      %v1941 = vpop.f32.mrf.mxu0
      %v1942 = vadd.f32 0.0, %v1941
      %v1943 = vpop.f32.mrf.mxu0
      %v1944 = vpop.f32.mrf.mxu0
      %v1945 = vadd.f32 0.0, %v1944
      %v1946 = vpop.f32.mrf.mxu0
      %1947 = vdwg.mxu0
      %1949 = vrot.lane.b32.xlu0 %v1937, 64
      %v1950 = vpop.permute.xlu0 %1949
      %1953 = vrot.lane.b32.xlu0 %v1945, 64
      %v1954 = vpop.permute.xlu0 %1953
      %v1956 = vsel %vm1831, %v1934, %v1950
      %v1957 = vsel %vm1831, %v1942, %v1954
      %v1958 = vpack.c.bf16 %v1956, %v1956
      %v1959 = vpack.c.bf16 %v1957, %v1957
      %v1960 = vld [vmem:[%s12] sm:$0xff]
      %v1961 = vld [vmem:[%s12 + $0x8] sm:$0xff]
      %v1962 = vld [vmem:[%s12 + $0x10] sm:$0xff]
      %v1963 = vld [vmem:[%s12 + $0x18] sm:$0xff]
      %v1964 = vld [vmem:[%s12 + $0x20] sm:$0xff]
      %v1965 = vld [vmem:[%s12 + $0x28] sm:$0xff]
      %v1966 = vld [vmem:[%s12 + $0x30] sm:$0xff]
      %v1967 = vld [vmem:[%s12 + $0x38] sm:$0xff]
      %v1968 = vld [vmem:[%s12 + $0x40] sm:$0xff]
      %v1969 = vld [vmem:[%s12 + $0x48] sm:$0xff]
      %v1970 = vld [vmem:[%s12 + $0x50] sm:$0xff]
      %v1971 = vld [vmem:[%s12 + $0x58] sm:$0xff]
      %v1972 = vld [vmem:[%s12 + $0x60] sm:$0xff]
      %v1973 = vld [vmem:[%s12 + $0x68] sm:$0xff]
      %v1974 = vld [vmem:[%s12 + $0x70] sm:$0xff]
      %v1975 = vld [vmem:[%s12 + $0x78] sm:$0xff]
      %v1976 = vld [vmem:[%s12 + $0x80] sm:$0xff]
      %v1977 = vld [vmem:[%s12 + $0x88] sm:$0xff]
      %v1978 = vld [vmem:[%s12 + $0x90] sm:$0xff]
      %v1979 = vld [vmem:[%s12 + $0x98] sm:$0xff]
      %v1980 = vld [vmem:[%s12 + $0xa0] sm:$0xff]
      %v1981 = vld [vmem:[%s12 + $0xa8] sm:$0xff]
      %v1982 = vld [vmem:[%s12 + $0xb0] sm:$0xff]
      %v1983 = vld [vmem:[%s12 + $0xb8] sm:$0xff]
      %v1984 = vld [vmem:[%s12 + $0xc0] sm:$0xff]
      %v1985 = vld [vmem:[%s12 + $0xc8] sm:$0xff]
      %v1986 = vld [vmem:[%s12 + $0xd0] sm:$0xff]
      %v1987 = vld [vmem:[%s12 + $0xd8] sm:$0xff]
      %v1988 = vld [vmem:[%s12 + $0xe0] sm:$0xff]
      %v1989 = vld [vmem:[%s12 + $0xe8] sm:$0xff]
      %v1990 = vld [vmem:[%s12 + $0xf0] sm:$0xff]
      %v1991 = vld [vmem:[%s12 + $0xf8] sm:$0xff]
      %v1992 = vld [vmem:[%s11] sm:$0x7]
      %1994 = vset.pattern.permute.xlu0 0
      %1995 = vperm.xlu0 %1994, %v1992
      %v1996 = vpop.permute.xlu0 %1995
      %v2030 = vunpack.c.l.b16 %v1960
      %v2031 = vunpack.c.h.b16 %v1960
      %v2032 = vunpack.c.l.b16 %v1961
      %v2033 = vunpack.c.h.b16 %v1961
      %v2034 = vunpack.c.l.b16 %v1962
      %v2035 = vunpack.c.h.b16 %v1962
      %v2036 = vunpack.c.l.b16 %v1963
      %v2037 = vunpack.c.h.b16 %v1963
      %v2038 = vunpack.c.l.b16 %v1964
      %v2039 = vunpack.c.h.b16 %v1964
      %v2040 = vunpack.c.l.b16 %v1965
      %v2041 = vunpack.c.h.b16 %v1965
      %v2042 = vunpack.c.l.b16 %v1966
      %v2043 = vunpack.c.h.b16 %v1966
      %v2044 = vunpack.c.l.b16 %v1967
      %v2045 = vunpack.c.h.b16 %v1967
      %v2046 = vunpack.c.l.b16 %v1968
      %v2047 = vunpack.c.h.b16 %v1968
      %v2048 = vunpack.c.l.b16 %v1969
      %v2049 = vunpack.c.h.b16 %v1969
      %v2050 = vunpack.c.l.b16 %v1970
      %v2051 = vunpack.c.h.b16 %v1970
      %v2052 = vunpack.c.l.b16 %v1971
      %v2053 = vunpack.c.h.b16 %v1971
      %v2054 = vunpack.c.l.b16 %v1972
      %v2055 = vunpack.c.h.b16 %v1972
      %v2056 = vunpack.c.l.b16 %v1973
      %v2057 = vunpack.c.h.b16 %v1973
      %v2058 = vunpack.c.l.b16 %v1974
      %v2059 = vunpack.c.h.b16 %v1974
      %v2060 = vunpack.c.l.b16 %v1975
      %v2061 = vunpack.c.h.b16 %v1975
      %v2062 = vunpack.c.l.b16 %v1976
      %v2063 = vunpack.c.h.b16 %v1976
      %v2064 = vunpack.c.l.b16 %v1977
      %v2065 = vunpack.c.h.b16 %v1977
      %v2066 = vunpack.c.l.b16 %v1978
      %v2067 = vunpack.c.h.b16 %v1978
      %v2068 = vunpack.c.l.b16 %v1979
      %v2069 = vunpack.c.h.b16 %v1979
      %v2070 = vunpack.c.l.b16 %v1980
      %v2071 = vunpack.c.h.b16 %v1980
      %v2072 = vunpack.c.l.b16 %v1981
      %v2073 = vunpack.c.h.b16 %v1981
      %v2074 = vunpack.c.l.b16 %v1982
      %v2075 = vunpack.c.h.b16 %v1982
      %v2076 = vunpack.c.l.b16 %v1983
      %v2077 = vunpack.c.h.b16 %v1983
      %v2078 = vunpack.c.l.b16 %v1984
      %v2079 = vunpack.c.h.b16 %v1984
      %v2080 = vunpack.c.l.b16 %v1985
      %v2081 = vunpack.c.h.b16 %v1985
      %v2082 = vunpack.c.l.b16 %v1986
      %v2083 = vunpack.c.h.b16 %v1986
      %v2084 = vunpack.c.l.b16 %v1987
      %v2085 = vunpack.c.h.b16 %v1987
      %v2086 = vunpack.c.l.b16 %v1988
      %v2087 = vunpack.c.h.b16 %v1988
      %v2088 = vunpack.c.l.b16 %v1989
      %v2089 = vunpack.c.h.b16 %v1989
      %v2090 = vunpack.c.l.b16 %v1990
      %v2091 = vunpack.c.h.b16 %v1990
      %v2092 = vunpack.c.l.b16 %v1991
      %v2093 = vunpack.c.h.b16 %v1991
      %v2094 = vpack.c.b16 %v2032, %v2030
      %v2095 = vpack.c.b16 %v2033, %v2031
      %v2096 = vpack.c.b16 %v2036, %v2034
      %v2097 = vpack.c.b16 %v2037, %v2035
      %v2098 = vpack.c.b16 %v2040, %v2038
      %v2099 = vpack.c.b16 %v2041, %v2039
      %v2100 = vpack.c.b16 %v2044, %v2042
      %v2101 = vpack.c.b16 %v2045, %v2043
      %v2102 = vpack.c.b16 %v2048, %v2046
      %v2103 = vpack.c.b16 %v2049, %v2047
      %v2104 = vpack.c.b16 %v2052, %v2050
      %v2105 = vpack.c.b16 %v2053, %v2051
      %v2106 = vpack.c.b16 %v2056, %v2054
      %v2107 = vpack.c.b16 %v2057, %v2055
      %v2108 = vpack.c.b16 %v2060, %v2058
      %v2109 = vpack.c.b16 %v2061, %v2059
      %v2110 = vpack.c.b16 %v2064, %v2062
      %v2111 = vpack.c.b16 %v2065, %v2063
      %v2112 = vpack.c.b16 %v2068, %v2066
      %v2113 = vpack.c.b16 %v2069, %v2067
      %v2114 = vpack.c.b16 %v2072, %v2070
      %v2115 = vpack.c.b16 %v2073, %v2071
      %v2116 = vpack.c.b16 %v2076, %v2074
      %v2117 = vpack.c.b16 %v2077, %v2075
      %v2118 = vpack.c.b16 %v2080, %v2078
      %v2119 = vpack.c.b16 %v2081, %v2079
      %v2120 = vpack.c.b16 %v2084, %v2082
      %v2121 = vpack.c.b16 %v2085, %v2083
      %v2122 = vpack.c.b16 %v2088, %v2086
      %v2123 = vpack.c.b16 %v2089, %v2087
      %v2124 = vpack.c.b16 %v2092, %v2090
      %v2125 = vpack.c.b16 %v2093, %v2091
      %2158 = vmatprep.subr.bf16.mxu0 %v2109
      %2159 = vmatpush1.bf16.msra.mxu0 %v2108
      %2160 = vmatprep.subr.bf16.mxu0 %v2107
      %2161 = vmatpush1.bf16.msra.mxu0 %v2106
      %2162 = vmatprep.subr.bf16.mxu0 %v2105
      %2163 = vmatpush1.bf16.msra.mxu0 %v2104
      %2164 = vmatprep.subr.bf16.mxu0 %v2103
      %2165 = vmatpush1.bf16.msra.mxu0 %v2102
      %2166 = vmatprep.subr.bf16.mxu0 %v2101
      %2167 = vmatpush1.bf16.msra.mxu0 %v2100
      %2168 = vmatprep.subr.bf16.mxu0 %v2099
      %2169 = vmatpush1.bf16.msra.mxu0 %v2098
      %2170 = vmatprep.subr.bf16.mxu0 %v2097
      %2171 = vmatpush1.bf16.msra.mxu0 %v2096
      %2172 = vmatprep.subr.bf16.mxu0 %v2095
      %2173 = vmatpush1.bf16.msra.mxu0 %v2094
      %2174 = vmatprep.subr.bf16.mxu0 %v2125
      %2175 = vmatpush2.bf16.msra.mxu0 %v2124
      %2176 = vmatprep.subr.bf16.mxu0 %v2123
      %2177 = vmatpush2.bf16.msra.mxu0 %v2122
      %2178 = vmatprep.subr.bf16.mxu0 %v2121
      %2179 = vmatpush2.bf16.msra.mxu0 %v2120
      %2180 = vmatprep.subr.bf16.mxu0 %v2119
      %2181 = vmatpush2.bf16.msra.mxu0 %v2118
      %2182 = vmatprep.subr.bf16.mxu0 %v2117
      %2183 = vmatpush2.bf16.msra.mxu0 %v2116
      %2184 = vmatprep.subr.bf16.mxu0 %v2115
      %2185 = vmatpush2.bf16.msra.mxu0 %v2114
      %2186 = vmatprep.subr.bf16.mxu0 %v2113
      %2187 = vmatpush2.bf16.msra.mxu0 %v2112
      %2188 = vmatprep.subr.bf16.mxu0 %v2111
      %2189 = vmatpush2.bf16.msra.mxu0 %v2110
      %2190 = vmatprep.mubr.bf16.mxu0 %v1959
      %2191 = vmatmul.mubr.bf16.gmra.mxu0 %v1958
      %v2192 = vpop.f32.mrf.mxu0
      %v2193 = vadd.f32 %v1996, %v2192
      %v2194 = vpop.f32.mrf.mxu0
      %v2195 = vadd.f32 %v1996, %v2194
      %v2196 = vpop.f32.mrf.mxu0
      %v2197 = vpop.f32.mrf.mxu0
      %2198 = vdwg.mxu0
      %v2199 = vand.u32 2147483647, %v2193
      %v2200 = vand.u32 2147483647, %v2195
      %v2201 = vsub.f32 0.0, %v2199
      %v2202 = vsub.f32 0.0, %v2200
      %v2203 = vmul.f32 %v2201, 1.442695
      %v2204 = vpow.pop %v2203
      %v2205 = vmul.f32 %v2202, 1.442695
      %v2206 = vpow.pop %v2205
      %v2207 = vadd.f32 %v2204, 1.0
      %v2208 = vadd.f32 %v2206, 1.0
      %v2209 = vrcp.pop %v2207
      %v2210 = vrcp.pop %v2208
      %vm2211 = vcmp.ge.f32.partialorder %v2193, 0.0
      %vm2212 = vcmp.ge.f32.partialorder %v2195, 0.0
      %v2213 = vmul.f32 %v2204, %v2209
      %v2214 = vmul.f32 %v2206, %v2210
      %v2215 = vsel %vm2211, %v2209, %v2213
      %v2216 = vsel %vm2212, %v2210, %v2214
      %v2219 = vcombine.low %v2215, %v2216
      %2221 = vst [vmem:[%s440] sm:$0x77] %v2219
      %p2222 = scmp.lt.s32.totalorder %s24, 1
      %s2223 = scalar_select %p2222, %s24, 1
      %s2224 = smul.addr %s2223, 2
      %s2225 = smul.addr %s2224, 4
      %s2226 = scalar_lea.vmem %s13, %s2225
      // Predicated region
      $region73: #{conv_autoencoder_forward.1} parent=71 // pred_check
        %p2227 = pneg %p320
      $region74: #{conv_autoencoder_forward.1} parent=71 // pred_check_branch
        %2229 = sbr.rel (%p2227) target = $region76
      $region75: #{conv_autoencoder_forward.1} parent=71 // pred_region
        _
      $region76: #{conv_autoencoder_forward.1} parent=71 // pred_fallthru
        _
    $region72: #{conv_autoencoder_forward.1} parent=5 // pred_fallthru
      _
    %p2230 = scmp.le.s32.totalorder 2, %s19
    // Predicated region
    $region77: #{conv_autoencoder_forward.1} parent=5 // pred_check
      %p2231 = pneg %p2230
    $region78: #{conv_autoencoder_forward.1} parent=5 // pred_check_branch
      %2233 = sbr.rel (%p2231) target = $region80
    $region79: #{conv_autoencoder_forward.1} parent=5 // pred_region
      %s2234 = ssub.s32 %s19, 2
      // Predicated region
      $region81: #{conv_autoencoder_forward.1} parent=79 // pred_check
        %p2235 = pneg %p326
      $region82: #{conv_autoencoder_forward.1} parent=79 // pred_check_branch
        %2237 = sbr.rel (%p2235) target = $region84
      $region83: #{conv_autoencoder_forward.1} parent=79 // pred_region
        %p2238 = scmp.lt.s32.totalorder %s25, 1
        %s2239 = scalar_select %p2238, %s25, 1
        %s2240 = smul.addr %s2239, 2
        %s2241 = smul.addr %s2240, 4
        %s2242 = scalar_lea.vmem %s13, %s2241
      $region84: #{conv_autoencoder_forward.1} parent=79 // pred_fallthru
        _
    $region80: #{conv_autoencoder_forward.1} parent=5 // pred_fallthru
      _
  $region6: #{conv_autoencoder_forward.1} parent=0 // loop_footer
    %s23 = sadd.s32 1, %s19
  $region7: #{conv_autoencoder_forward.1} parent=0 // loop_footer_branch
    %18 = sbr.rel target = $region3
  $region8: #{conv_autoencoder_forward.1} parent=0 // loop_exit
    _

</llo_original>
